<compile_context>
chip_gen: v7x
topology: tpu7x:2x2x1
jax: 0.10.0
libtpu: 0.0.40
codegen_flags: <defaults>
</compile_context>

<pallas_src>
import functools

import jax
import jax.numpy as jnp
from jax.experimental import pallas as pl
from jax.experimental.pallas import tpu as pltpu


# ---------------------------------------------------------------------------
# Parameter slab layout: every slot is 128 lanes wide; weight slots are 128
# rows (full MXU tile), bias slot is 8 rows. All offsets are 8-row aligned.
# ---------------------------------------------------------------------------
_LANES = 128
_O_WIH = 0      # rows 0..127 : row 0 = W_ih^T (1,H), row 1 = b_ih + b_hh
_O_WHH = 128    # rows 0..H-1 , lanes 0..H-1 : W_hh^T
_O_WFC1 = 256   # rows 0..H-1 , lanes 0..19  : W_fc1^T
_O_WFC2 = 384   # rows 0..19  , lanes 0..1   : W_fc2^T
_O_BFC2 = 512   # row 0       , lanes 0..1   : b_fc2
_SLAB_ROWS = 520


def _round_up(v, m):
    return ((v + m - 1) // m) * m


def pack_params(params, *, n_in=1, n_hidden=10):
    """Pack all parameters into one (520, 128) f32 slab (once, off hot path)."""
    assert n_in == 1, "forward pass x[:, i:i+1] implies n_in == 1"
    wih_t, whh_t, bih, bhh, wfc1_t, wfc2_t, bfc2 = params
    H = n_hidden
    slab = jnp.zeros((_SLAB_ROWS, _LANES), jnp.float32)
    slab = slab.at[_O_WIH, :H].set(wih_t[0])                 # W_ih^T row
    slab = slab.at[_O_WIH + 1, :H].set((bih + bhh)[0])       # fused bias row
    slab = slab.at[_O_WHH:_O_WHH + H, :H].set(whh_t)         # W_hh^T
    slab = slab.at[_O_WFC1:_O_WFC1 + H, :20].set(wfc1_t)     # W_fc1^T
    slab = slab.at[_O_WFC2:_O_WFC2 + 20, :2].set(wfc2_t)     # W_fc2^T
    slab = slab.at[_O_BFC2, :2].set(bfc2[0])                 # b_fc2
    return slab


# ---------------------------------------------------------------------------
# Kernel
# ---------------------------------------------------------------------------
def _rnn_system_kernel(x_ref, h0_ref, slab_ref, out_ref, *, seq):
    # Direct Ref slices at (8,128)-aligned offsets, full 128-lane width:
    # these lower to plain aligned VMEM loads (no masking / relayout).
    wih = slab_ref[_O_WIH:_O_WIH + 128, :]      # (128,128) row0=W_ih^T, row1=bias
    whh = slab_ref[_O_WHH:_O_WHH + 128, :]      # (128,128) zero-padded W_hh^T
    wfc1 = slab_ref[_O_WFC1:_O_WFC1 + 128, :]   # (128,128) zero-padded W_fc1^T
    wfc2 = slab_ref[_O_WFC2:_O_WFC2 + 128, :]   # (128,128) zero-padded W_fc2^T
    bfc2 = slab_ref[_O_BFC2:_O_BFC2 + 1, :]     # (1,128)   zero-padded b_fc2

    h = h0_ref[...]                             # (block_b, 128)

    # Serial recurrence (seq is small -> fully unrolled, one basic block).
    # u_i = [x_i, 1, 0...] @ [W_ih^T ; b_ih+b_hh ; 0...] = x_i*W_ih^T + bias.
    # u_i is independent of h, so the scheduler can hide it under the serial
    # (h @ W_hh) -> tanh chain; computing it in-loop bounds live vregs.
    for i in range(seq):
        u_i = jnp.dot(x_ref[i], wih, preferred_element_type=jnp.float32)
        h = jnp.tanh(u_i + jnp.dot(h, whh, preferred_element_type=jnp.float32))

    # fc1 (no bias) -> ReLU -> fc2 (+bias); all full-width unmasked tiles.
    y = jnp.maximum(jnp.dot(h, wfc1, preferred_element_type=jnp.float32), 0.0)
    out_ref[...] = jnp.dot(y, wfc2, preferred_element_type=jnp.float32) + bfc2


def rnn_system(x, h0, param_slab, *, n_hidden=10, block_b=None):
    """Run the RNNSystem forward pass. x: (B, S), h0: (B, H) -> (B, 2)."""
    B, S = x.shape
    H = n_hidden
    if block_b is None:
        # Fat batch blocks amortize the ~0.35us/step grid overhead; 8-row
        # aligned so every activation tile is a clean (8,128) multiple.
        block_b = min(256, _round_up(B, 8))
    block_b = _round_up(block_b, 8)
    B_pad = _round_up(B, block_b)
    n_blocks = B_pad // block_b

    # Layout plumbing (wrapper-side, once): step-major x with lane0 = value,
    # lane1 = 1.0 (bias carrier); zero-padded lanes / batch rows are inert.
    x_steps = jnp.zeros((S, B_pad, _LANES), jnp.float32)
    x_steps = x_steps.at[:, :B, 0].set(x.T)
    x_steps = x_steps.at[:, :B, 1].set(1.0)
    h0_pad = jnp.zeros((B_pad, _LANES), jnp.float32).at[:B, :H].set(h0)

    kernel = functools.partial(_rnn_system_kernel, seq=S)
    out_pad = pl.pallas_call(
        kernel,
        out_shape=jax.ShapeDtypeStruct((B_pad, _LANES), jnp.float32),
        grid=(n_blocks,),
        in_specs=[
            pl.BlockSpec((S, block_b, _LANES), lambda j: (0, j, 0)),
            pl.BlockSpec((block_b, _LANES), lambda j: (j, 0)),
            pl.BlockSpec((_SLAB_ROWS, _LANES), lambda j: (0, 0)),
        ],
        out_specs=pl.BlockSpec((block_b, _LANES), lambda j: (j, 0)),
        compiler_params=pltpu.CompilerParams(
            dimension_semantics=("parallel",)),
    )(x_steps, h0_pad, param_slab)
    return out_pad[:B, :2]


# ---------------------------------------------------------------------------
# Params + pure-JAX reference (matches torch op order)
# ---------------------------------------------------------------------------
def init_params(key, n_in=1, n_hidden=10):
    ks = jax.random.split(key, 7)
    s_rnn = 1.0 / jnp.sqrt(n_hidden)
    s_fc1 = 1.0 / jnp.sqrt(n_hidden)
    s_fc2 = 1.0 / jnp.sqrt(20.0)
    # stored pre-transposed: (in, out)
    wih_t = jax.random.uniform(ks[0], (n_in, n_hidden), jnp.float32, -s_rnn, s_rnn)
    whh_t = jax.random.uniform(ks[1], (n_hidden, n_hidden), jnp.float32, -s_rnn, s_rnn)
    bih = jax.random.uniform(ks[2], (1, n_hidden), jnp.float32, -s_rnn, s_rnn)
    bhh = jax.random.uniform(ks[3], (1, n_hidden), jnp.float32, -s_rnn, s_rnn)
    wfc1_t = jax.random.uniform(ks[4], (n_hidden, 20), jnp.float32, -s_fc1, s_fc1)
    wfc2_t = jax.random.uniform(ks[5], (20, 2), jnp.float32, -s_fc2, s_fc2)
    bfc2 = jax.random.uniform(ks[6], (1, 2), jnp.float32, -s_fc2, s_fc2)
    return (wih_t, whh_t, bih, bhh, wfc1_t, wfc2_t, bfc2)


def rnn_system_ref(x, h0, params):
    wih_t, whh_t, bih, bhh, wfc1_t, wfc2_t, bfc2 = params
    h = h0
    for i in range(x.shape[1]):
        xi = x[:, i:i + 1]
        h = jnp.tanh(xi @ wih_t + bih + h @ whh_t + bhh)
    y = jnp.maximum(h @ wfc1_t, 0.0)
    return y @ wfc2_t + bfc2


if __name__ == "__main__":
    key = jax.random.PRNGKey(0)
    k_x, k_h, k_p = jax.random.split(key, 3)

    batch, seq, n_in, n_hidden = 8, 8, 1, 10
    x = jax.random.normal(k_x, (batch, seq), jnp.float32)
    h0 = jax.random.normal(k_h, (batch, n_hidden), jnp.float32)
    params = init_params(k_p, n_in=n_in, n_hidden=n_hidden)
    slab = pack_params(params, n_in=n_in, n_hidden=n_hidden)

    out = rnn_system(x, h0, slab, n_hidden=n_hidden)
    out = jax.block_until_ready(out)

    ref = rnn_system_ref(x, h0, params)
    assert out.shape == (batch, 2)
    assert jnp.allclose(out, ref, atol=2e-5, rtol=2e-5), (out, ref)
    print("KERNEL_OK")
</pallas_src>

<mosaic_0001>
module attributes {stable_mosaic.version = 11 : i64} {
  func.func @_rnn_system_kernel(%arg0: i32, %arg1: memref<8x8x128xf32, #tpu.memory_space<vmem>>, %arg2: memref<8x128xf32, #tpu.memory_space<vmem>>, %arg3: memref<520x128xf32, #tpu.memory_space<vmem>>, %arg4: memref<8x128xf32, #tpu.memory_space<vmem>>) attributes {dimension_semantics = [#tpu.dimension_semantics<parallel>], iteration_bounds = array<i64: 1>, scalar_prefetch = 0 : i64, scratch_operands = 0 : i64, tpu.core_type = #tpu.core_type<tc>, window_params = [{transform_indices = @transform_0, window_bounds = array<i64: 8, 8, 128>}, {transform_indices = @transform_1, window_bounds = array<i64: 8, 128>}, {pipeline_mode = #tpu.pipeline_mode<synchronous>, transform_indices = @transform_2, window_bounds = array<i64: 520, 128>}, {transform_indices = @transform_3, window_bounds = array<i64: 8, 128>}]} {
    %c0 = arith.constant 0 : index
    %c0_0 = arith.constant 0 : index
    %0 = vector.load %arg3[%c0, %c0_0] : memref<520x128xf32, #tpu.memory_space<vmem>>, vector<128x128xf32>
    %c128 = arith.constant 128 : index
    %c0_1 = arith.constant 0 : index
    %1 = vector.load %arg3[%c128, %c0_1] : memref<520x128xf32, #tpu.memory_space<vmem>>, vector<128x128xf32>
    %c256 = arith.constant 256 : index
    %c0_2 = arith.constant 0 : index
    %2 = vector.load %arg3[%c256, %c0_2] : memref<520x128xf32, #tpu.memory_space<vmem>>, vector<128x128xf32>
    %c384 = arith.constant 384 : index
    %c0_3 = arith.constant 0 : index
    %3 = vector.load %arg3[%c384, %c0_3] : memref<520x128xf32, #tpu.memory_space<vmem>>, vector<128x128xf32>
    %c512 = arith.constant 512 : index
    %c0_4 = arith.constant 0 : index
    %4 = vector.load %arg3[%c512, %c0_4] : memref<520x128xf32, #tpu.memory_space<vmem>>, vector<1x128xf32>
    %c0_5 = arith.constant 0 : index
    %c0_6 = arith.constant 0 : index
    %5 = vector.load %arg2[%c0_5, %c0_6] : memref<8x128xf32, #tpu.memory_space<vmem>>, vector<8x128xf32>
    %c0_7 = arith.constant 0 : index
    %c0_8 = arith.constant 0 : index
    %c0_9 = arith.constant 0 : index
    %6 = vector.load %arg1[%c0_7, %c0_8, %c0_9] : memref<8x8x128xf32, #tpu.memory_space<vmem>>, vector<1x8x128xf32>
    %7 = vector.shape_cast %6 : vector<1x8x128xf32> to vector<8x128xf32>
    %cst = arith.constant dense<0.000000e+00> : vector<8x128xf32>
    %8 = tpu.matmul %7, %0, %cst {dimension_numbers = #tpu.dot_dimension_numbers<[1], [0], [0], [1], [0, 0, 1, 1], [], []>} : vector<8x128xf32>, vector<128x128xf32>, vector<8x128xf32> -> vector<8x128xf32>
    %cst_10 = arith.constant dense<0.000000e+00> : vector<8x128xf32>
    %9 = tpu.matmul %5, %1, %cst_10 {dimension_numbers = #tpu.dot_dimension_numbers<[1], [0], [0], [1], [0, 0, 1, 1], [], []>} : vector<8x128xf32>, vector<128x128xf32>, vector<8x128xf32> -> vector<8x128xf32>
    %10 = arith.addf %8, %9 : vector<8x128xf32>
    %11 = math.tanh %10 : vector<8x128xf32>
    %c1 = arith.constant 1 : index
    %c0_11 = arith.constant 0 : index
    %c0_12 = arith.constant 0 : index
    %12 = vector.load %arg1[%c1, %c0_11, %c0_12] : memref<8x8x128xf32, #tpu.memory_space<vmem>>, vector<1x8x128xf32>
    %13 = vector.shape_cast %12 : vector<1x8x128xf32> to vector<8x128xf32>
    %cst_13 = arith.constant dense<0.000000e+00> : vector<8x128xf32>
    %14 = tpu.matmul %13, %0, %cst_13 {dimension_numbers = #tpu.dot_dimension_numbers<[1], [0], [0], [1], [0, 0, 1, 1], [], []>} : vector<8x128xf32>, vector<128x128xf32>, vector<8x128xf32> -> vector<8x128xf32>
    %cst_14 = arith.constant dense<0.000000e+00> : vector<8x128xf32>
    %15 = tpu.matmul %11, %1, %cst_14 {dimension_numbers = #tpu.dot_dimension_numbers<[1], [0], [0], [1], [0, 0, 1, 1], [], []>} : vector<8x128xf32>, vector<128x128xf32>, vector<8x128xf32> -> vector<8x128xf32>
    %16 = arith.addf %14, %15 : vector<8x128xf32>
    %17 = math.tanh %16 : vector<8x128xf32>
    %c2 = arith.constant 2 : index
    %c0_15 = arith.constant 0 : index
    %c0_16 = arith.constant 0 : index
    %18 = vector.load %arg1[%c2, %c0_15, %c0_16] : memref<8x8x128xf32, #tpu.memory_space<vmem>>, vector<1x8x128xf32>
    %19 = vector.shape_cast %18 : vector<1x8x128xf32> to vector<8x128xf32>
    %cst_17 = arith.constant dense<0.000000e+00> : vector<8x128xf32>
    %20 = tpu.matmul %19, %0, %cst_17 {dimension_numbers = #tpu.dot_dimension_numbers<[1], [0], [0], [1], [0, 0, 1, 1], [], []>} : vector<8x128xf32>, vector<128x128xf32>, vector<8x128xf32> -> vector<8x128xf32>
    %cst_18 = arith.constant dense<0.000000e+00> : vector<8x128xf32>
    %21 = tpu.matmul %17, %1, %cst_18 {dimension_numbers = #tpu.dot_dimension_numbers<[1], [0], [0], [1], [0, 0, 1, 1], [], []>} : vector<8x128xf32>, vector<128x128xf32>, vector<8x128xf32> -> vector<8x128xf32>
    %22 = arith.addf %20, %21 : vector<8x128xf32>
    %23 = math.tanh %22 : vector<8x128xf32>
    %c3 = arith.constant 3 : index
    %c0_19 = arith.constant 0 : index
    %c0_20 = arith.constant 0 : index
    %24 = vector.load %arg1[%c3, %c0_19, %c0_20] : memref<8x8x128xf32, #tpu.memory_space<vmem>>, vector<1x8x128xf32>
    %25 = vector.shape_cast %24 : vector<1x8x128xf32> to vector<8x128xf32>
    %cst_21 = arith.constant dense<0.000000e+00> : vector<8x128xf32>
    %26 = tpu.matmul %25, %0, %cst_21 {dimension_numbers = #tpu.dot_dimension_numbers<[1], [0], [0], [1], [0, 0, 1, 1], [], []>} : vector<8x128xf32>, vector<128x128xf32>, vector<8x128xf32> -> vector<8x128xf32>
    %cst_22 = arith.constant dense<0.000000e+00> : vector<8x128xf32>
    %27 = tpu.matmul %23, %1, %cst_22 {dimension_numbers = #tpu.dot_dimension_numbers<[1], [0], [0], [1], [0, 0, 1, 1], [], []>} : vector<8x128xf32>, vector<128x128xf32>, vector<8x128xf32> -> vector<8x128xf32>
    %28 = arith.addf %26, %27 : vector<8x128xf32>
    %29 = math.tanh %28 : vector<8x128xf32>
    %c4 = arith.constant 4 : index
    %c0_23 = arith.constant 0 : index
    %c0_24 = arith.constant 0 : index
    %30 = vector.load %arg1[%c4, %c0_23, %c0_24] : memref<8x8x128xf32, #tpu.memory_space<vmem>>, vector<1x8x128xf32>
    %31 = vector.shape_cast %30 : vector<1x8x128xf32> to vector<8x128xf32>
    %cst_25 = arith.constant dense<0.000000e+00> : vector<8x128xf32>
    %32 = tpu.matmul %31, %0, %cst_25 {dimension_numbers = #tpu.dot_dimension_numbers<[1], [0], [0], [1], [0, 0, 1, 1], [], []>} : vector<8x128xf32>, vector<128x128xf32>, vector<8x128xf32> -> vector<8x128xf32>
    %cst_26 = arith.constant dense<0.000000e+00> : vector<8x128xf32>
    %33 = tpu.matmul %29, %1, %cst_26 {dimension_numbers = #tpu.dot_dimension_numbers<[1], [0], [0], [1], [0, 0, 1, 1], [], []>} : vector<8x128xf32>, vector<128x128xf32>, vector<8x128xf32> -> vector<8x128xf32>
    %34 = arith.addf %32, %33 : vector<8x128xf32>
    %35 = math.tanh %34 : vector<8x128xf32>
    %c5 = arith.constant 5 : index
    %c0_27 = arith.constant 0 : index
    %c0_28 = arith.constant 0 : index
    %36 = vector.load %arg1[%c5, %c0_27, %c0_28] : memref<8x8x128xf32, #tpu.memory_space<vmem>>, vector<1x8x128xf32>
    %37 = vector.shape_cast %36 : vector<1x8x128xf32> to vector<8x128xf32>
    %cst_29 = arith.constant dense<0.000000e+00> : vector<8x128xf32>
    %38 = tpu.matmul %37, %0, %cst_29 {dimension_numbers = #tpu.dot_dimension_numbers<[1], [0], [0], [1], [0, 0, 1, 1], [], []>} : vector<8x128xf32>, vector<128x128xf32>, vector<8x128xf32> -> vector<8x128xf32>
    %cst_30 = arith.constant dense<0.000000e+00> : vector<8x128xf32>
    %39 = tpu.matmul %35, %1, %cst_30 {dimension_numbers = #tpu.dot_dimension_numbers<[1], [0], [0], [1], [0, 0, 1, 1], [], []>} : vector<8x128xf32>, vector<128x128xf32>, vector<8x128xf32> -> vector<8x128xf32>
    %40 = arith.addf %38, %39 : vector<8x128xf32>
    %41 = math.tanh %40 : vector<8x128xf32>
    %c6 = arith.constant 6 : index
    %c0_31 = arith.constant 0 : index
    %c0_32 = arith.constant 0 : index
    %42 = vector.load %arg1[%c6, %c0_31, %c0_32] : memref<8x8x128xf32, #tpu.memory_space<vmem>>, vector<1x8x128xf32>
    %43 = vector.shape_cast %42 : vector<1x8x128xf32> to vector<8x128xf32>
    %cst_33 = arith.constant dense<0.000000e+00> : vector<8x128xf32>
    %44 = tpu.matmul %43, %0, %cst_33 {dimension_numbers = #tpu.dot_dimension_numbers<[1], [0], [0], [1], [0, 0, 1, 1], [], []>} : vector<8x128xf32>, vector<128x128xf32>, vector<8x128xf32> -> vector<8x128xf32>
    %cst_34 = arith.constant dense<0.000000e+00> : vector<8x128xf32>
    %45 = tpu.matmul %41, %1, %cst_34 {dimension_numbers = #tpu.dot_dimension_numbers<[1], [0], [0], [1], [0, 0, 1, 1], [], []>} : vector<8x128xf32>, vector<128x128xf32>, vector<8x128xf32> -> vector<8x128xf32>
    %46 = arith.addf %44, %45 : vector<8x128xf32>
    %47 = math.tanh %46 : vector<8x128xf32>
    %c7 = arith.constant 7 : index
    %c0_35 = arith.constant 0 : index
    %c0_36 = arith.constant 0 : index
    %48 = vector.load %arg1[%c7, %c0_35, %c0_36] : memref<8x8x128xf32, #tpu.memory_space<vmem>>, vector<1x8x128xf32>
    %49 = vector.shape_cast %48 : vector<1x8x128xf32> to vector<8x128xf32>
    %cst_37 = arith.constant dense<0.000000e+00> : vector<8x128xf32>
    %50 = tpu.matmul %49, %0, %cst_37 {dimension_numbers = #tpu.dot_dimension_numbers<[1], [0], [0], [1], [0, 0, 1, 1], [], []>} : vector<8x128xf32>, vector<128x128xf32>, vector<8x128xf32> -> vector<8x128xf32>
    %cst_38 = arith.constant dense<0.000000e+00> : vector<8x128xf32>
    %51 = tpu.matmul %47, %1, %cst_38 {dimension_numbers = #tpu.dot_dimension_numbers<[1], [0], [0], [1], [0, 0, 1, 1], [], []>} : vector<8x128xf32>, vector<128x128xf32>, vector<8x128xf32> -> vector<8x128xf32>
    %52 = arith.addf %50, %51 : vector<8x128xf32>
    %53 = math.tanh %52 : vector<8x128xf32>
    %cst_39 = arith.constant dense<0.000000e+00> : vector<8x128xf32>
    %54 = tpu.matmul %53, %2, %cst_39 {dimension_numbers = #tpu.dot_dimension_numbers<[1], [0], [0], [1], [0, 0, 1, 1], [], []>} : vector<8x128xf32>, vector<128x128xf32>, vector<8x128xf32> -> vector<8x128xf32>
    %cst_40 = arith.constant 0.000000e+00 : f32
    %55 = vector.broadcast %cst_40 : f32 to vector<8x128xf32>
    %56 = arith.maximumf %54, %55 : vector<8x128xf32>
    %cst_41 = arith.constant dense<0.000000e+00> : vector<8x128xf32>
    %57 = tpu.matmul %56, %3, %cst_41 {dimension_numbers = #tpu.dot_dimension_numbers<[1], [0], [0], [1], [0, 0, 1, 1], [], []>} : vector<8x128xf32>, vector<128x128xf32>, vector<8x128xf32> -> vector<8x128xf32>
    %58 = vector.broadcast %4 : vector<1x128xf32> to vector<8x128xf32>
    %59 = arith.addf %57, %58 : vector<8x128xf32>
    %c0_42 = arith.constant 0 : index
    %c0_43 = arith.constant 0 : index
    %60 = vector.load %arg4[%c0_42, %c0_43] : memref<8x128xf32, #tpu.memory_space<vmem>>, vector<8x128xf32>
    tpu.vector_store %arg4[%c0_42, %c0_43], %59 {strides = array<i32>} : memref<8x128xf32, #tpu.memory_space<vmem>>, vector<8x128xf32>,
    return
  }
  func.func @transform_0(%arg0: i32) -> (i32, i32, i32) {
    %c0_i32 = arith.constant 0 : i32
    %c0_i32_0 = arith.constant 0 : i32
    %c0_i32_1 = arith.constant 0 : i32
    return %c0_i32, %arg0, %c0_i32_0 : i32, i32, i32
  }
  func.func @transform_1(%arg0: i32) -> (i32, i32) {
    %c0_i32 = arith.constant 0 : i32
    %c0_i32_0 = arith.constant 0 : i32
    return %arg0, %c0_i32 : i32, i32
  }
  func.func @transform_2(%arg0: i32) -> (i32, i32) {
    %c0_i32 = arith.constant 0 : i32
    %c0_i32_0 = arith.constant 0 : i32
    %c0_i32_1 = arith.constant 0 : i32
    return %c0_i32, %c0_i32_0 : i32, i32
  }
  func.func @transform_3(%arg0: i32) -> (i32, i32) {
    %c0_i32 = arith.constant 0 : i32
    %c0_i32_0 = arith.constant 0 : i32
    return %arg0, %c0_i32 : i32, i32
  }
}

</mosaic_0001>

<llo_original>
// kernel: tpu_custom_call.1
$region0: #{tpu_custom_call.1}
  #allocation0 [shape = 'u32[]', space=smem, size = 0x4, offset = 0x4, fixed_abs, tag = 'smem constant byte address 0x4 - core index']
  #allocation1 [shape = 'u32[144,128]{1,0:T(1,128)}', space=vmem, size = 0x12000, scoped, tag = 'internal scratch']
  %s0 = inlined_call_operand.hbm [shape: f32[8,8,128], index: 0, kind: input, shape index: {}]
  %s1 = inlined_call_operand.hbm [shape: f32[8,128], index: 1, kind: input, shape index: {}]
  %s2 = inlined_call_operand.hbm [shape: f32[520,128], index: 2, kind: input, shape index: {}]
  %s3 = inlined_call_operand.hbm [shape: f32[8,128], index: 3, kind: output, shape index: {}]
  %s4 = sld [smem:[#allocation0]]
  $region34: #{tpu_custom_call.1} parent=0
    _
  %s6 = ssub.s32 1, %s4
  %s7 = scalar_select 0, %s6, %s4
  $region1: #{tpu_custom_call.1} parent=0
    #allocation2 [shape = 'u8[32768]{0}', space=vmem, size = 0x8000, scoped, tag = 'input window, operand 0, single buffered']
    #allocation3 [shape = 's32[1]{0}', space=sflag, size = 0x4, scoped, tag = 'scoped memory for tpu_custom_call.1']
    #allocation4 [shape = 's32[1]{0}', space=sflag, size = 0x4, scoped, tag = 'scoped memory for tpu_custom_call.1']
    #allocation5 [shape = 'u8[4096]{0}', space=vmem, size = 0x1000, scoped, tag = 'input window, operand 1, single buffered']
    #allocation6 [shape = 's32[1]{0}', space=sflag, size = 0x4, scoped, tag = 'scoped memory for tpu_custom_call.1']
    #allocation7 [shape = 'u8[266240]{0}', space=vmem, size = 0x41000, scoped, tag = 'input window, operand 2, single buffered']
    #allocation8 [shape = 'u8[4096]{0}', space=vmem, size = 0x1000, scoped, tag = 'output window, operand 0, single buffered']
    %8 = vsyncpa [#allocation3], 0
    %9 = vsyncpa [#allocation6], 0
    %10 = vsyncpa [#allocation4], 0
    // Predicated region
    $region2: #{tpu_custom_call.1} parent=1 // pred_check
      _
    $region3: #{tpu_custom_call.1} parent=1 // pred_check_branch
      %12 = sbr.rel (0) target = $region5
    $region4: #{tpu_custom_call.1} parent=1 // pred_region
      %s14 = ssub.s32 1024, 1024
      %15 = vsyncadd [#allocation3], %s14
      %s16 = sshll.u32 [#allocation2], 4
      %s17 = int_to_ptr.vmem [resolvable:$true] %s16
      %22 = dma.hbm_to_vmem [thread:$0]  %s0, 1024, %s17, [#allocation3], 128, 128, 8
    $region5: #{tpu_custom_call.1} parent=1 // pred_fallthru
      _
    // Predicated region
    $region6: #{tpu_custom_call.1} parent=1 // pred_check
      _
    $region7: #{tpu_custom_call.1} parent=1 // pred_check_branch
      %24 = sbr.rel (0) target = $region9
    $region8: #{tpu_custom_call.1} parent=1 // pred_region
      %s26 = ssub.s32 128, 128
      %27 = vsyncadd [#allocation6], %s26
      %s29 = sshll.u32 [#allocation5], 4
      %s30 = int_to_ptr.vmem [resolvable:$true] %s29
      %32 = dma.hbm_to_vmem [thread:$0]  %s1, 128, %s30, [#allocation6]
    $region9: #{tpu_custom_call.1} parent=1 // pred_fallthru
      _
    // Predicated region
    $region10: #{tpu_custom_call.1} parent=1 // pred_check
      _
    $region11: #{tpu_custom_call.1} parent=1 // pred_check_branch
      %34 = sbr.rel (0) target = $region13
    $region12: #{tpu_custom_call.1} parent=1 // pred_region
      %s36 = ssub.s32 8320, 8320
      %37 = vsyncadd [#allocation6], %s36
      %s38 = sshll.u32 [#allocation7], 4
      %s39 = int_to_ptr.vmem [resolvable:$true] %s38
      %44 = dma.hbm_to_vmem [thread:$0]  %s2, 8320, %s39, [#allocation6], 128, 128, 8
    $region13: #{tpu_custom_call.1} parent=1 // pred_fallthru
      _
    // Predicated region
    $region14: #{tpu_custom_call.1} parent=1 // pred_check
      _
    $region15: #{tpu_custom_call.1} parent=1 // pred_check_branch
      %46 = sbr.rel (0) target = $region17
    $region16: #{tpu_custom_call.1} parent=1 // pred_region
      %47 = dma.done [#allocation3], 1024
    $region17: #{tpu_custom_call.1} parent=1 // pred_fallthru
      _
    // Predicated region
    $region18: #{tpu_custom_call.1} parent=1 // pred_check
      _
    $region19: #{tpu_custom_call.1} parent=1 // pred_check_branch
      %49 = sbr.rel (0) target = $region21
    $region20: #{tpu_custom_call.1} parent=1 // pred_region
      %50 = dma.done [#allocation6], 128
    $region21: #{tpu_custom_call.1} parent=1 // pred_fallthru
      _
    // Predicated region
    $region22: #{tpu_custom_call.1} parent=1 // pred_check
      _
    $region23: #{tpu_custom_call.1} parent=1 // pred_check_branch
      %52 = sbr.rel (0) target = $region25
    $region24: #{tpu_custom_call.1} parent=1 // pred_region
      %53 = dma.done [#allocation6], 8320
    $region25: #{tpu_custom_call.1} parent=1 // pred_fallthru
      _
    %v54 = vld [vmem:[#allocation7] sm:$0xff]
    %v55 = vld [vmem:[#allocation7 + $0x8] sm:$0xff]
    %v56 = vld [vmem:[#allocation7 + $0x10] sm:$0xff]
    %v57 = vld [vmem:[#allocation7 + $0x18] sm:$0xff]
    %v58 = vld [vmem:[#allocation7 + $0x20] sm:$0xff]
    %v59 = vld [vmem:[#allocation7 + $0x28] sm:$0xff]
    %v60 = vld [vmem:[#allocation7 + $0x30] sm:$0xff]
    %v61 = vld [vmem:[#allocation7 + $0x38] sm:$0xff]
    %v62 = vld [vmem:[#allocation7 + $0x40] sm:$0xff]
    %v63 = vld [vmem:[#allocation7 + $0x48] sm:$0xff]
    %v64 = vld [vmem:[#allocation7 + $0x50] sm:$0xff]
    %v65 = vld [vmem:[#allocation7 + $0x58] sm:$0xff]
    %v66 = vld [vmem:[#allocation7 + $0x60] sm:$0xff]
    %v67 = vld [vmem:[#allocation7 + $0x68] sm:$0xff]
    %v68 = vld [vmem:[#allocation7 + $0x70] sm:$0xff]
    %v69 = vld [vmem:[#allocation7 + $0x78] sm:$0xff]
    %v70 = vld [vmem:[#allocation7 + $0x80] sm:$0xff]
    %v71 = vld [vmem:[#allocation7 + $0x88] sm:$0xff]
    %v72 = vld [vmem:[#allocation7 + $0x90] sm:$0xff]
    %v73 = vld [vmem:[#allocation7 + $0x98] sm:$0xff]
    %v74 = vld [vmem:[#allocation7 + $0xa0] sm:$0xff]
    %v75 = vld [vmem:[#allocation7 + $0xa8] sm:$0xff]
    %v76 = vld [vmem:[#allocation7 + $0xb0] sm:$0xff]
    %v77 = vld [vmem:[#allocation7 + $0xb8] sm:$0xff]
    %v78 = vld [vmem:[#allocation7 + $0xc0] sm:$0xff]
    %v79 = vld [vmem:[#allocation7 + $0xc8] sm:$0xff]
    %v80 = vld [vmem:[#allocation7 + $0xd0] sm:$0xff]
    %v81 = vld [vmem:[#allocation7 + $0xd8] sm:$0xff]
    %v82 = vld [vmem:[#allocation7 + $0xe0] sm:$0xff]
    %v83 = vld [vmem:[#allocation7 + $0xe8] sm:$0xff]
    %v84 = vld [vmem:[#allocation7 + $0xf0] sm:$0xff]
    %v85 = vld [vmem:[#allocation7 + $0xf8] sm:$0xff]
    %v86 = vld [vmem:[#allocation7 + $0x100] sm:$0xff]
    %v87 = vld [vmem:[#allocation7 + $0x108] sm:$0xff]
    %v88 = vld [vmem:[#allocation7 + $0x110] sm:$0xff]
    %v89 = vld [vmem:[#allocation7 + $0x118] sm:$0xff]
    %v90 = vld [vmem:[#allocation7 + $0x120] sm:$0xff]
    %v91 = vld [vmem:[#allocation7 + $0x128] sm:$0xff]
    %v92 = vld [vmem:[#allocation7 + $0x130] sm:$0xff]
    %v93 = vld [vmem:[#allocation7 + $0x138] sm:$0xff]
    %v94 = vld [vmem:[#allocation7 + $0x140] sm:$0xff]
    %v95 = vld [vmem:[#allocation7 + $0x148] sm:$0xff]
    %v96 = vld [vmem:[#allocation7 + $0x150] sm:$0xff]
    %v97 = vld [vmem:[#allocation7 + $0x158] sm:$0xff]
    %v98 = vld [vmem:[#allocation7 + $0x160] sm:$0xff]
    %v99 = vld [vmem:[#allocation7 + $0x168] sm:$0xff]
    %v100 = vld [vmem:[#allocation7 + $0x170] sm:$0xff]
    %v101 = vld [vmem:[#allocation7 + $0x178] sm:$0xff]
    %v102 = vld [vmem:[#allocation7 + $0x180] sm:$0xff]
    %v103 = vld [vmem:[#allocation7 + $0x188] sm:$0xff]
    %v104 = vld [vmem:[#allocation7 + $0x190] sm:$0xff]
    %v105 = vld [vmem:[#allocation7 + $0x198] sm:$0xff]
    %v106 = vld [vmem:[#allocation7 + $0x1a0] sm:$0xff]
    %v107 = vld [vmem:[#allocation7 + $0x1a8] sm:$0xff]
    %v108 = vld [vmem:[#allocation7 + $0x1b0] sm:$0xff]
    %v109 = vld [vmem:[#allocation7 + $0x1b8] sm:$0xff]
    %v110 = vld [vmem:[#allocation7 + $0x1c0] sm:$0xff]
    %v111 = vld [vmem:[#allocation7 + $0x1c8] sm:$0xff]
    %v112 = vld [vmem:[#allocation7 + $0x1d0] sm:$0xff]
    %v113 = vld [vmem:[#allocation7 + $0x1d8] sm:$0xff]
    %v114 = vld [vmem:[#allocation7 + $0x1e0] sm:$0xff]
    %v115 = vld [vmem:[#allocation7 + $0x1e8] sm:$0xff]
    %v116 = vld [vmem:[#allocation7 + $0x1f0] sm:$0xff]
    %v117 = vld [vmem:[#allocation7 + $0x1f8] sm:$0xff]
    %v118 = vld [vmem:[#allocation7 + $0x200] sm:$0x1]
    %v119 = vld [vmem:[#allocation5] sm:$0xff]
    %v120 = vld [vmem:[#allocation2] sm:$0xff]
    %121 = vmatprep.subr.mxu0 0.0
    %122 = vmatpush1.msra.mxu0 %v70
    %123 = vmatprep.subr.mxu0 0.0
    %124 = vmatpush1.msra.mxu0 %v71
    %125 = vmatprep.subr.mxu0 0.0
    %126 = vmatpush1.msra.mxu0 %v72
    %127 = vmatprep.subr.mxu0 0.0
    %128 = vmatpush1.msra.mxu0 %v73
    %129 = vmatprep.subr.mxu0 0.0
    %130 = vmatpush1.msra.mxu0 %v74
    %131 = vmatprep.subr.mxu0 0.0
    %132 = vmatpush1.msra.mxu0 %v75
    %133 = vmatprep.subr.mxu0 0.0
    %134 = vmatpush1.msra.mxu0 %v76
    %135 = vmatprep.subr.mxu0 0.0
    %136 = vmatpush1.msra.mxu0 %v77
    %137 = vmatprep.subr.mxu0 0.0
    %138 = vmatpush1.msra.mxu0 %v78
    %139 = vmatprep.subr.mxu0 0.0
    %140 = vmatpush1.msra.mxu0 %v79
    %141 = vmatprep.subr.mxu0 0.0
    %142 = vmatpush1.msra.mxu0 %v80
    %143 = vmatprep.subr.mxu0 0.0
    %144 = vmatpush1.msra.mxu0 %v81
    %145 = vmatprep.subr.mxu0 0.0
    %146 = vmatpush1.msra.mxu0 %v82
    %147 = vmatprep.subr.mxu0 0.0
    %148 = vmatpush1.msra.mxu0 %v83
    %149 = vmatprep.subr.mxu0 0.0
    %150 = vmatpush1.msra.mxu0 %v84
    %151 = vmatprep.subr.mxu0 0.0
    %152 = vmatpush1.msra.mxu0 %v85
    %153 = vmatprep.subr.mxu0 0.0
    %154 = vmatpush1.msra.mxu0 0.0
    %155 = vmatprep.subr.mxu0 0.0
    %156 = vmatpush1.msra.mxu0 0.0
    %157 = vmatprep.subr.mxu0 0.0
    %158 = vmatpush1.msra.mxu0 0.0
    %159 = vmatprep.subr.mxu0 0.0
    %160 = vmatpush1.msra.mxu0 0.0
    %161 = vmatprep.subr.mxu0 0.0
    %162 = vmatpush1.msra.mxu0 0.0
    %163 = vmatprep.subr.mxu0 0.0
    %164 = vmatpush1.msra.mxu0 0.0
    %165 = vmatprep.subr.mxu0 0.0
    %166 = vmatpush1.msra.mxu0 0.0
    %167 = vmatprep.subr.mxu0 0.0
    %168 = vmatpush1.msra.mxu0 0.0
    %169 = vmatprep.subr.mxu0 0.0
    %170 = vmatpush1.msra.mxu0 0.0
    %171 = vmatprep.subr.mxu0 0.0
    %172 = vmatpush1.msra.mxu0 0.0
    %173 = vmatprep.subr.mxu0 0.0
    %174 = vmatpush1.msra.mxu0 0.0
    %175 = vmatprep.subr.mxu0 0.0
    %176 = vmatpush1.msra.mxu0 0.0
    %177 = vmatprep.subr.mxu0 0.0
    %178 = vmatpush1.msra.mxu0 0.0
    %179 = vmatprep.subr.mxu0 0.0
    %180 = vmatpush1.msra.mxu0 0.0
    %181 = vmatprep.subr.mxu0 0.0
    %182 = vmatpush1.msra.mxu0 0.0
    %183 = vmatprep.subr.mxu0 0.0
    %184 = vmatpush1.msra.mxu0 0.0
    %185 = vmatprep.mubr.f32.mxu0 0.0
    %186 = vmatmul.mubr.f32.gmra.mrb[0].mxu0 %v119
    %v187 = vpop.f32.mrb[0].mxu0
    %v188 = vadd.f32 0.0, %v187
    %v189 = vpop.f32.mrb[0].mxu0
    %190 = vdwg.mxu0
    %191 = vmatprep.subr.mxu0 0.0
    %192 = vmatpush1.msra.mxu0 %v54
    %193 = vmatprep.subr.mxu0 0.0
    %194 = vmatpush1.msra.mxu0 %v55
    %195 = vmatprep.subr.mxu0 0.0
    %196 = vmatpush1.msra.mxu0 %v56
    %197 = vmatprep.subr.mxu0 0.0
    %198 = vmatpush1.msra.mxu0 %v57
    %199 = vmatprep.subr.mxu0 0.0
    %200 = vmatpush1.msra.mxu0 %v58
    %201 = vmatprep.subr.mxu0 0.0
    %202 = vmatpush1.msra.mxu0 %v59
    %203 = vmatprep.subr.mxu0 0.0
    %204 = vmatpush1.msra.mxu0 %v60
    %205 = vmatprep.subr.mxu0 0.0
    %206 = vmatpush1.msra.mxu0 %v61
    %207 = vmatprep.subr.mxu0 0.0
    %208 = vmatpush1.msra.mxu0 %v62
    %209 = vmatprep.subr.mxu0 0.0
    %210 = vmatpush1.msra.mxu0 %v63
    %211 = vmatprep.subr.mxu0 0.0
    %212 = vmatpush1.msra.mxu0 %v64
    %213 = vmatprep.subr.mxu0 0.0
    %214 = vmatpush1.msra.mxu0 %v65
    %215 = vmatprep.subr.mxu0 0.0
    %216 = vmatpush1.msra.mxu0 %v66
    %217 = vmatprep.subr.mxu0 0.0
    %218 = vmatpush1.msra.mxu0 %v67
    %219 = vmatprep.subr.mxu0 0.0
    %220 = vmatpush1.msra.mxu0 %v68
    %221 = vmatprep.subr.mxu0 0.0
    %222 = vmatpush1.msra.mxu0 %v69
    %223 = vmatprep.subr.mxu0 0.0
    %224 = vmatpush1.msra.mxu0 0.0
    %225 = vmatprep.subr.mxu0 0.0
    %226 = vmatpush1.msra.mxu0 0.0
    %227 = vmatprep.subr.mxu0 0.0
    %228 = vmatpush1.msra.mxu0 0.0
    %229 = vmatprep.subr.mxu0 0.0
    %230 = vmatpush1.msra.mxu0 0.0
    %231 = vmatprep.subr.mxu0 0.0
    %232 = vmatpush1.msra.mxu0 0.0
    %233 = vmatprep.subr.mxu0 0.0
    %234 = vmatpush1.msra.mxu0 0.0
    %235 = vmatprep.subr.mxu0 0.0
    %236 = vmatpush1.msra.mxu0 0.0
    %237 = vmatprep.subr.mxu0 0.0
    %238 = vmatpush1.msra.mxu0 0.0
    %239 = vmatprep.subr.mxu0 0.0
    %240 = vmatpush1.msra.mxu0 0.0
    %241 = vmatprep.subr.mxu0 0.0
    %242 = vmatpush1.msra.mxu0 0.0
    %243 = vmatprep.subr.mxu0 0.0
    %244 = vmatpush1.msra.mxu0 0.0
    %245 = vmatprep.subr.mxu0 0.0
    %246 = vmatpush1.msra.mxu0 0.0
    %247 = vmatprep.subr.mxu0 0.0
    %248 = vmatpush1.msra.mxu0 0.0
    %249 = vmatprep.subr.mxu0 0.0
    %250 = vmatpush1.msra.mxu0 0.0
    %251 = vmatprep.subr.mxu0 0.0
    %252 = vmatpush1.msra.mxu0 0.0
    %253 = vmatprep.subr.mxu0 0.0
    %254 = vmatpush1.msra.mxu0 0.0
    %255 = vmatprep.mubr.f32.mxu0 0.0
    %256 = vmatmul.mubr.f32.gmra.mrb[0].mxu0 %v120
    %v257 = vpop.f32.mrb[0].mxu0
    %v258 = vadd.f32 %v188, %v257
    %v259 = vpop.f32.mrb[0].mxu0
    %260 = vdwg.mxu0
    %v261 = vtanh.pop %v258
    %s262 = scalar_lea.vmem [#allocation2], 8
    %v263 = vld [vmem:[%s262] sm:$0xff]
    %264 = vmatprep.subr.mxu0 0.0
    %265 = vmatpush1.msra.mxu0 %v70
    %266 = vmatprep.subr.mxu0 0.0
    %267 = vmatpush1.msra.mxu0 %v71
    %268 = vmatprep.subr.mxu0 0.0
    %269 = vmatpush1.msra.mxu0 %v72
    %270 = vmatprep.subr.mxu0 0.0
    %271 = vmatpush1.msra.mxu0 %v73
    %272 = vmatprep.subr.mxu0 0.0
    %273 = vmatpush1.msra.mxu0 %v74
    %274 = vmatprep.subr.mxu0 0.0
    %275 = vmatpush1.msra.mxu0 %v75
    %276 = vmatprep.subr.mxu0 0.0
    %277 = vmatpush1.msra.mxu0 %v76
    %278 = vmatprep.subr.mxu0 0.0
    %279 = vmatpush1.msra.mxu0 %v77
    %280 = vmatprep.subr.mxu0 0.0
    %281 = vmatpush1.msra.mxu0 %v78
    %282 = vmatprep.subr.mxu0 0.0
    %283 = vmatpush1.msra.mxu0 %v79
    %284 = vmatprep.subr.mxu0 0.0
    %285 = vmatpush1.msra.mxu0 %v80
    %286 = vmatprep.subr.mxu0 0.0
    %287 = vmatpush1.msra.mxu0 %v81
    %288 = vmatprep.subr.mxu0 0.0
    %289 = vmatpush1.msra.mxu0 %v82
    %290 = vmatprep.subr.mxu0 0.0
    %291 = vmatpush1.msra.mxu0 %v83
    %292 = vmatprep.subr.mxu0 0.0
    %293 = vmatpush1.msra.mxu0 %v84
    %294 = vmatprep.subr.mxu0 0.0
    %295 = vmatpush1.msra.mxu0 %v85
    %296 = vmatprep.subr.mxu0 0.0
    %297 = vmatpush1.msra.mxu0 0.0
    %298 = vmatprep.subr.mxu0 0.0
    %299 = vmatpush1.msra.mxu0 0.0
    %300 = vmatprep.subr.mxu0 0.0
    %301 = vmatpush1.msra.mxu0 0.0
    %302 = vmatprep.subr.mxu0 0.0
    %303 = vmatpush1.msra.mxu0 0.0
    %304 = vmatprep.subr.mxu0 0.0
    %305 = vmatpush1.msra.mxu0 0.0
    %306 = vmatprep.subr.mxu0 0.0
    %307 = vmatpush1.msra.mxu0 0.0
    %308 = vmatprep.subr.mxu0 0.0
    %309 = vmatpush1.msra.mxu0 0.0
    %310 = vmatprep.subr.mxu0 0.0
    %311 = vmatpush1.msra.mxu0 0.0
    %312 = vmatprep.subr.mxu0 0.0
    %313 = vmatpush1.msra.mxu0 0.0
    %314 = vmatprep.subr.mxu0 0.0
    %315 = vmatpush1.msra.mxu0 0.0
    %316 = vmatprep.subr.mxu0 0.0
    %317 = vmatpush1.msra.mxu0 0.0
    %318 = vmatprep.subr.mxu0 0.0
    %319 = vmatpush1.msra.mxu0 0.0
    %320 = vmatprep.subr.mxu0 0.0
    %321 = vmatpush1.msra.mxu0 0.0
    %322 = vmatprep.subr.mxu0 0.0
    %323 = vmatpush1.msra.mxu0 0.0
    %324 = vmatprep.subr.mxu0 0.0
    %325 = vmatpush1.msra.mxu0 0.0
    %326 = vmatprep.subr.mxu0 0.0
    %327 = vmatpush1.msra.mxu0 0.0
    %328 = vmatprep.mubr.f32.mxu0 0.0
    %329 = vmatmul.mubr.f32.gmra.mrb[0].mxu0 %v261
    %v330 = vpop.f32.mrb[0].mxu0
    %v331 = vadd.f32 0.0, %v330
    %v332 = vpop.f32.mrb[0].mxu0
    %333 = vdwg.mxu0
    %334 = vmatprep.subr.mxu0 0.0
    %335 = vmatpush1.msra.mxu0 %v54
    %336 = vmatprep.subr.mxu0 0.0
    %337 = vmatpush1.msra.mxu0 %v55
    %338 = vmatprep.subr.mxu0 0.0
    %339 = vmatpush1.msra.mxu0 %v56
    %340 = vmatprep.subr.mxu0 0.0
    %341 = vmatpush1.msra.mxu0 %v57
    %342 = vmatprep.subr.mxu0 0.0
    %343 = vmatpush1.msra.mxu0 %v58
    %344 = vmatprep.subr.mxu0 0.0
    %345 = vmatpush1.msra.mxu0 %v59
    %346 = vmatprep.subr.mxu0 0.0
    %347 = vmatpush1.msra.mxu0 %v60
    %348 = vmatprep.subr.mxu0 0.0
    %349 = vmatpush1.msra.mxu0 %v61
    %350 = vmatprep.subr.mxu0 0.0
    %351 = vmatpush1.msra.mxu0 %v62
    %352 = vmatprep.subr.mxu0 0.0
    %353 = vmatpush1.msra.mxu0 %v63
    %354 = vmatprep.subr.mxu0 0.0
    %355 = vmatpush1.msra.mxu0 %v64
    %356 = vmatprep.subr.mxu0 0.0
    %357 = vmatpush1.msra.mxu0 %v65
    %358 = vmatprep.subr.mxu0 0.0
    %359 = vmatpush1.msra.mxu0 %v66
    %360 = vmatprep.subr.mxu0 0.0
    %361 = vmatpush1.msra.mxu0 %v67
    %362 = vmatprep.subr.mxu0 0.0
    %363 = vmatpush1.msra.mxu0 %v68
    %364 = vmatprep.subr.mxu0 0.0
    %365 = vmatpush1.msra.mxu0 %v69
    %366 = vmatprep.subr.mxu0 0.0
    %367 = vmatpush1.msra.mxu0 0.0
    %368 = vmatprep.subr.mxu0 0.0
    %369 = vmatpush1.msra.mxu0 0.0
    %370 = vmatprep.subr.mxu0 0.0
    %371 = vmatpush1.msra.mxu0 0.0
    %372 = vmatprep.subr.mxu0 0.0
    %373 = vmatpush1.msra.mxu0 0.0
    %374 = vmatprep.subr.mxu0 0.0
    %375 = vmatpush1.msra.mxu0 0.0
    %376 = vmatprep.subr.mxu0 0.0
    %377 = vmatpush1.msra.mxu0 0.0
    %378 = vmatprep.subr.mxu0 0.0
    %379 = vmatpush1.msra.mxu0 0.0
    %380 = vmatprep.subr.mxu0 0.0
    %381 = vmatpush1.msra.mxu0 0.0
    %382 = vmatprep.subr.mxu0 0.0
    %383 = vmatpush1.msra.mxu0 0.0
    %384 = vmatprep.subr.mxu0 0.0
    %385 = vmatpush1.msra.mxu0 0.0
    %386 = vmatprep.subr.mxu0 0.0
    %387 = vmatpush1.msra.mxu0 0.0
    %388 = vmatprep.subr.mxu0 0.0
    %389 = vmatpush1.msra.mxu0 0.0
    %390 = vmatprep.subr.mxu0 0.0
    %391 = vmatpush1.msra.mxu0 0.0
    %392 = vmatprep.subr.mxu0 0.0
    %393 = vmatpush1.msra.mxu0 0.0
    %394 = vmatprep.subr.mxu0 0.0
    %395 = vmatpush1.msra.mxu0 0.0
    %396 = vmatprep.subr.mxu0 0.0
    %397 = vmatpush1.msra.mxu0 0.0
    %398 = vmatprep.mubr.f32.mxu0 0.0
    %399 = vmatmul.mubr.f32.gmra.mrb[0].mxu0 %v263
    %v400 = vpop.f32.mrb[0].mxu0
    %v401 = vadd.f32 %v331, %v400
    %v402 = vpop.f32.mrb[0].mxu0
    %403 = vdwg.mxu0
    %v404 = vtanh.pop %v401
    %s405 = scalar_lea.vmem [#allocation2], 16
    %v406 = vld [vmem:[%s405] sm:$0xff]
    %407 = vmatprep.subr.mxu0 0.0
    %408 = vmatpush1.msra.mxu0 %v70
    %409 = vmatprep.subr.mxu0 0.0
    %410 = vmatpush1.msra.mxu0 %v71
    %411 = vmatprep.subr.mxu0 0.0
    %412 = vmatpush1.msra.mxu0 %v72
    %413 = vmatprep.subr.mxu0 0.0
    %414 = vmatpush1.msra.mxu0 %v73
    %415 = vmatprep.subr.mxu0 0.0
    %416 = vmatpush1.msra.mxu0 %v74
    %417 = vmatprep.subr.mxu0 0.0
    %418 = vmatpush1.msra.mxu0 %v75
    %419 = vmatprep.subr.mxu0 0.0
    %420 = vmatpush1.msra.mxu0 %v76
    %421 = vmatprep.subr.mxu0 0.0
    %422 = vmatpush1.msra.mxu0 %v77
    %423 = vmatprep.subr.mxu0 0.0
    %424 = vmatpush1.msra.mxu0 %v78
    %425 = vmatprep.subr.mxu0 0.0
    %426 = vmatpush1.msra.mxu0 %v79
    %427 = vmatprep.subr.mxu0 0.0
    %428 = vmatpush1.msra.mxu0 %v80
    %429 = vmatprep.subr.mxu0 0.0
    %430 = vmatpush1.msra.mxu0 %v81
    %431 = vmatprep.subr.mxu0 0.0
    %432 = vmatpush1.msra.mxu0 %v82
    %433 = vmatprep.subr.mxu0 0.0
    %434 = vmatpush1.msra.mxu0 %v83
    %435 = vmatprep.subr.mxu0 0.0
    %436 = vmatpush1.msra.mxu0 %v84
    %437 = vmatprep.subr.mxu0 0.0
    %438 = vmatpush1.msra.mxu0 %v85
    %439 = vmatprep.subr.mxu0 0.0
    %440 = vmatpush1.msra.mxu0 0.0
    %441 = vmatprep.subr.mxu0 0.0
    %442 = vmatpush1.msra.mxu0 0.0
    %443 = vmatprep.subr.mxu0 0.0
    %444 = vmatpush1.msra.mxu0 0.0
    %445 = vmatprep.subr.mxu0 0.0
    %446 = vmatpush1.msra.mxu0 0.0
    %447 = vmatprep.subr.mxu0 0.0
    %448 = vmatpush1.msra.mxu0 0.0
    %449 = vmatprep.subr.mxu0 0.0
    %450 = vmatpush1.msra.mxu0 0.0
    %451 = vmatprep.subr.mxu0 0.0
    %452 = vmatpush1.msra.mxu0 0.0
    %453 = vmatprep.subr.mxu0 0.0
    %454 = vmatpush1.msra.mxu0 0.0
    %455 = vmatprep.subr.mxu0 0.0
    %456 = vmatpush1.msra.mxu0 0.0
    %457 = vmatprep.subr.mxu0 0.0
    %458 = vmatpush1.msra.mxu0 0.0
    %459 = vmatprep.subr.mxu0 0.0
    %460 = vmatpush1.msra.mxu0 0.0
    %461 = vmatprep.subr.mxu0 0.0
    %462 = vmatpush1.msra.mxu0 0.0
    %463 = vmatprep.subr.mxu0 0.0
    %464 = vmatpush1.msra.mxu0 0.0
    %465 = vmatprep.subr.mxu0 0.0
    %466 = vmatpush1.msra.mxu0 0.0
    %467 = vmatprep.subr.mxu0 0.0
    %468 = vmatpush1.msra.mxu0 0.0
    %469 = vmatprep.subr.mxu0 0.0
    %470 = vmatpush1.msra.mxu0 0.0
    %471 = vmatprep.mubr.f32.mxu0 0.0
    %472 = vmatmul.mubr.f32.gmra.mrb[0].mxu0 %v404
    %v473 = vpop.f32.mrb[0].mxu0
    %v474 = vadd.f32 0.0, %v473
    %v475 = vpop.f32.mrb[0].mxu0
    %476 = vdwg.mxu0
    %477 = vmatprep.subr.mxu0 0.0
    %478 = vmatpush1.msra.mxu0 %v54
    %479 = vmatprep.subr.mxu0 0.0
    %480 = vmatpush1.msra.mxu0 %v55
    %481 = vmatprep.subr.mxu0 0.0
    %482 = vmatpush1.msra.mxu0 %v56
    %483 = vmatprep.subr.mxu0 0.0
    %484 = vmatpush1.msra.mxu0 %v57
    %485 = vmatprep.subr.mxu0 0.0
    %486 = vmatpush1.msra.mxu0 %v58
    %487 = vmatprep.subr.mxu0 0.0
    %488 = vmatpush1.msra.mxu0 %v59
    %489 = vmatprep.subr.mxu0 0.0
    %490 = vmatpush1.msra.mxu0 %v60
    %491 = vmatprep.subr.mxu0 0.0
    %492 = vmatpush1.msra.mxu0 %v61
    %493 = vmatprep.subr.mxu0 0.0
    %494 = vmatpush1.msra.mxu0 %v62
    %495 = vmatprep.subr.mxu0 0.0
    %496 = vmatpush1.msra.mxu0 %v63
    %497 = vmatprep.subr.mxu0 0.0
    %498 = vmatpush1.msra.mxu0 %v64
    %499 = vmatprep.subr.mxu0 0.0
    %500 = vmatpush1.msra.mxu0 %v65
    %501 = vmatprep.subr.mxu0 0.0
    %502 = vmatpush1.msra.mxu0 %v66
    %503 = vmatprep.subr.mxu0 0.0
    %504 = vmatpush1.msra.mxu0 %v67
    %505 = vmatprep.subr.mxu0 0.0
    %506 = vmatpush1.msra.mxu0 %v68
    %507 = vmatprep.subr.mxu0 0.0
    %508 = vmatpush1.msra.mxu0 %v69
    %509 = vmatprep.subr.mxu0 0.0
    %510 = vmatpush1.msra.mxu0 0.0
    %511 = vmatprep.subr.mxu0 0.0
    %512 = vmatpush1.msra.mxu0 0.0
    %513 = vmatprep.subr.mxu0 0.0
    %514 = vmatpush1.msra.mxu0 0.0
    %515 = vmatprep.subr.mxu0 0.0
    %516 = vmatpush1.msra.mxu0 0.0
    %517 = vmatprep.subr.mxu0 0.0
    %518 = vmatpush1.msra.mxu0 0.0
    %519 = vmatprep.subr.mxu0 0.0
    %520 = vmatpush1.msra.mxu0 0.0
    %521 = vmatprep.subr.mxu0 0.0
    %522 = vmatpush1.msra.mxu0 0.0
    %523 = vmatprep.subr.mxu0 0.0
    %524 = vmatpush1.msra.mxu0 0.0
    %525 = vmatprep.subr.mxu0 0.0
    %526 = vmatpush1.msra.mxu0 0.0
    %527 = vmatprep.subr.mxu0 0.0
    %528 = vmatpush1.msra.mxu0 0.0
    %529 = vmatprep.subr.mxu0 0.0
    %530 = vmatpush1.msra.mxu0 0.0
    %531 = vmatprep.subr.mxu0 0.0
    %532 = vmatpush1.msra.mxu0 0.0
    %533 = vmatprep.subr.mxu0 0.0
    %534 = vmatpush1.msra.mxu0 0.0
    %535 = vmatprep.subr.mxu0 0.0
    %536 = vmatpush1.msra.mxu0 0.0
    %537 = vmatprep.subr.mxu0 0.0
    %538 = vmatpush1.msra.mxu0 0.0
    %539 = vmatprep.subr.mxu0 0.0
    %540 = vmatpush1.msra.mxu0 0.0
    %541 = vmatprep.mubr.f32.mxu0 0.0
    %542 = vmatmul.mubr.f32.gmra.mrb[0].mxu0 %v406
    %v543 = vpop.f32.mrb[0].mxu0
    %v544 = vadd.f32 %v474, %v543
    %v545 = vpop.f32.mrb[0].mxu0
    %546 = vdwg.mxu0
    %v547 = vtanh.pop %v544
    %s548 = scalar_lea.vmem [#allocation2], 24
    %v549 = vld [vmem:[%s548] sm:$0xff]
    %550 = vmatprep.subr.mxu0 0.0
    %551 = vmatpush1.msra.mxu0 %v70
    %552 = vmatprep.subr.mxu0 0.0
    %553 = vmatpush1.msra.mxu0 %v71
    %554 = vmatprep.subr.mxu0 0.0
    %555 = vmatpush1.msra.mxu0 %v72
    %556 = vmatprep.subr.mxu0 0.0
    %557 = vmatpush1.msra.mxu0 %v73
    %558 = vmatprep.subr.mxu0 0.0
    %559 = vmatpush1.msra.mxu0 %v74
    %560 = vmatprep.subr.mxu0 0.0
    %561 = vmatpush1.msra.mxu0 %v75
    %562 = vmatprep.subr.mxu0 0.0
    %563 = vmatpush1.msra.mxu0 %v76
    %564 = vmatprep.subr.mxu0 0.0
    %565 = vmatpush1.msra.mxu0 %v77
    %566 = vmatprep.subr.mxu0 0.0
    %567 = vmatpush1.msra.mxu0 %v78
    %568 = vmatprep.subr.mxu0 0.0
    %569 = vmatpush1.msra.mxu0 %v79
    %570 = vmatprep.subr.mxu0 0.0
    %571 = vmatpush1.msra.mxu0 %v80
    %572 = vmatprep.subr.mxu0 0.0
    %573 = vmatpush1.msra.mxu0 %v81
    %574 = vmatprep.subr.mxu0 0.0
    %575 = vmatpush1.msra.mxu0 %v82
    %576 = vmatprep.subr.mxu0 0.0
    %577 = vmatpush1.msra.mxu0 %v83
    %578 = vmatprep.subr.mxu0 0.0
    %579 = vmatpush1.msra.mxu0 %v84
    %580 = vmatprep.subr.mxu0 0.0
    %581 = vmatpush1.msra.mxu0 %v85
    %582 = vmatprep.subr.mxu0 0.0
    %583 = vmatpush1.msra.mxu0 0.0
    %584 = vmatprep.subr.mxu0 0.0
    %585 = vmatpush1.msra.mxu0 0.0
    %586 = vmatprep.subr.mxu0 0.0
    %587 = vmatpush1.msra.mxu0 0.0
    %588 = vmatprep.subr.mxu0 0.0
    %589 = vmatpush1.msra.mxu0 0.0
    %590 = vmatprep.subr.mxu0 0.0
    %591 = vmatpush1.msra.mxu0 0.0
    %592 = vmatprep.subr.mxu0 0.0
    %593 = vmatpush1.msra.mxu0 0.0
    %594 = vmatprep.subr.mxu0 0.0
    %595 = vmatpush1.msra.mxu0 0.0
    %596 = vmatprep.subr.mxu0 0.0
    %597 = vmatpush1.msra.mxu0 0.0
    %598 = vmatprep.subr.mxu0 0.0
    %599 = vmatpush1.msra.mxu0 0.0
    %600 = vmatprep.subr.mxu0 0.0
    %601 = vmatpush1.msra.mxu0 0.0
    %602 = vmatprep.subr.mxu0 0.0
    %603 = vmatpush1.msra.mxu0 0.0
    %604 = vmatprep.subr.mxu0 0.0
    %605 = vmatpush1.msra.mxu0 0.0
    %606 = vmatprep.subr.mxu0 0.0
    %607 = vmatpush1.msra.mxu0 0.0
    %608 = vmatprep.subr.mxu0 0.0
    %609 = vmatpush1.msra.mxu0 0.0
    %610 = vmatprep.subr.mxu0 0.0
    %611 = vmatpush1.msra.mxu0 0.0
    %612 = vmatprep.subr.mxu0 0.0
    %613 = vmatpush1.msra.mxu0 0.0
    %614 = vmatprep.mubr.f32.mxu0 0.0
    %615 = vmatmul.mubr.f32.gmra.mrb[0].mxu0 %v547
    %v616 = vpop.f32.mrb[0].mxu0
    %v617 = vadd.f32 0.0, %v616
    %v618 = vpop.f32.mrb[0].mxu0
    %619 = vdwg.mxu0
    %620 = vmatprep.subr.mxu0 0.0
    %621 = vmatpush1.msra.mxu0 %v54
    %622 = vmatprep.subr.mxu0 0.0
    %623 = vmatpush1.msra.mxu0 %v55
    %624 = vmatprep.subr.mxu0 0.0
    %625 = vmatpush1.msra.mxu0 %v56
    %626 = vmatprep.subr.mxu0 0.0
    %627 = vmatpush1.msra.mxu0 %v57
    %628 = vmatprep.subr.mxu0 0.0
    %629 = vmatpush1.msra.mxu0 %v58
    %630 = vmatprep.subr.mxu0 0.0
    %631 = vmatpush1.msra.mxu0 %v59
    %632 = vmatprep.subr.mxu0 0.0
    %633 = vmatpush1.msra.mxu0 %v60
    %634 = vmatprep.subr.mxu0 0.0
    %635 = vmatpush1.msra.mxu0 %v61
    %636 = vmatprep.subr.mxu0 0.0
    %637 = vmatpush1.msra.mxu0 %v62
    %638 = vmatprep.subr.mxu0 0.0
    %639 = vmatpush1.msra.mxu0 %v63
    %640 = vmatprep.subr.mxu0 0.0
    %641 = vmatpush1.msra.mxu0 %v64
    %642 = vmatprep.subr.mxu0 0.0
    %643 = vmatpush1.msra.mxu0 %v65
    %644 = vmatprep.subr.mxu0 0.0
    %645 = vmatpush1.msra.mxu0 %v66
    %646 = vmatprep.subr.mxu0 0.0
    %647 = vmatpush1.msra.mxu0 %v67
    %648 = vmatprep.subr.mxu0 0.0
    %649 = vmatpush1.msra.mxu0 %v68
    %650 = vmatprep.subr.mxu0 0.0
    %651 = vmatpush1.msra.mxu0 %v69
    %652 = vmatprep.subr.mxu0 0.0
    %653 = vmatpush1.msra.mxu0 0.0
    %654 = vmatprep.subr.mxu0 0.0
    %655 = vmatpush1.msra.mxu0 0.0
    %656 = vmatprep.subr.mxu0 0.0
    %657 = vmatpush1.msra.mxu0 0.0
    %658 = vmatprep.subr.mxu0 0.0
    %659 = vmatpush1.msra.mxu0 0.0
    %660 = vmatprep.subr.mxu0 0.0
    %661 = vmatpush1.msra.mxu0 0.0
    %662 = vmatprep.subr.mxu0 0.0
    %663 = vmatpush1.msra.mxu0 0.0
    %664 = vmatprep.subr.mxu0 0.0
    %665 = vmatpush1.msra.mxu0 0.0
    %666 = vmatprep.subr.mxu0 0.0
    %667 = vmatpush1.msra.mxu0 0.0
    %668 = vmatprep.subr.mxu0 0.0
    %669 = vmatpush1.msra.mxu0 0.0
    %670 = vmatprep.subr.mxu0 0.0
    %671 = vmatpush1.msra.mxu0 0.0
    %672 = vmatprep.subr.mxu0 0.0
    %673 = vmatpush1.msra.mxu0 0.0
    %674 = vmatprep.subr.mxu0 0.0
    %675 = vmatpush1.msra.mxu0 0.0
    %676 = vmatprep.subr.mxu0 0.0
    %677 = vmatpush1.msra.mxu0 0.0
    %678 = vmatprep.subr.mxu0 0.0
    %679 = vmatpush1.msra.mxu0 0.0
    %680 = vmatprep.subr.mxu0 0.0
    %681 = vmatpush1.msra.mxu0 0.0
    %682 = vmatprep.subr.mxu0 0.0
    %683 = vmatpush1.msra.mxu0 0.0
    %684 = vmatprep.mubr.f32.mxu0 0.0
    %685 = vmatmul.mubr.f32.gmra.mrb[0].mxu0 %v549
    %v686 = vpop.f32.mrb[0].mxu0
    %v687 = vadd.f32 %v617, %v686
    %v688 = vpop.f32.mrb[0].mxu0
    %689 = vdwg.mxu0
    %v690 = vtanh.pop %v687
    %s691 = scalar_lea.vmem [#allocation2], 32
    %v692 = vld [vmem:[%s691] sm:$0xff]
    %693 = vmatprep.subr.mxu0 0.0
    %694 = vmatpush1.msra.mxu0 %v70
    %695 = vmatprep.subr.mxu0 0.0
    %696 = vmatpush1.msra.mxu0 %v71
    %697 = vmatprep.subr.mxu0 0.0
    %698 = vmatpush1.msra.mxu0 %v72
    %699 = vmatprep.subr.mxu0 0.0
    %700 = vmatpush1.msra.mxu0 %v73
    %701 = vmatprep.subr.mxu0 0.0
    %702 = vmatpush1.msra.mxu0 %v74
    %703 = vmatprep.subr.mxu0 0.0
    %704 = vmatpush1.msra.mxu0 %v75
    %705 = vmatprep.subr.mxu0 0.0
    %706 = vmatpush1.msra.mxu0 %v76
    %707 = vmatprep.subr.mxu0 0.0
    %708 = vmatpush1.msra.mxu0 %v77
    %709 = vmatprep.subr.mxu0 0.0
    %710 = vmatpush1.msra.mxu0 %v78
    %711 = vmatprep.subr.mxu0 0.0
    %712 = vmatpush1.msra.mxu0 %v79
    %713 = vmatprep.subr.mxu0 0.0
    %714 = vmatpush1.msra.mxu0 %v80
    %715 = vmatprep.subr.mxu0 0.0
    %716 = vmatpush1.msra.mxu0 %v81
    %717 = vmatprep.subr.mxu0 0.0
    %718 = vmatpush1.msra.mxu0 %v82
    %719 = vmatprep.subr.mxu0 0.0
    %720 = vmatpush1.msra.mxu0 %v83
    %721 = vmatprep.subr.mxu0 0.0
    %722 = vmatpush1.msra.mxu0 %v84
    %723 = vmatprep.subr.mxu0 0.0
    %724 = vmatpush1.msra.mxu0 %v85
    %725 = vmatprep.subr.mxu0 0.0
    %726 = vmatpush1.msra.mxu0 0.0
    %727 = vmatprep.subr.mxu0 0.0
    %728 = vmatpush1.msra.mxu0 0.0
    %729 = vmatprep.subr.mxu0 0.0
    %730 = vmatpush1.msra.mxu0 0.0
    %731 = vmatprep.subr.mxu0 0.0
    %732 = vmatpush1.msra.mxu0 0.0
    %733 = vmatprep.subr.mxu0 0.0
    %734 = vmatpush1.msra.mxu0 0.0
    %735 = vmatprep.subr.mxu0 0.0
    %736 = vmatpush1.msra.mxu0 0.0
    %737 = vmatprep.subr.mxu0 0.0
    %738 = vmatpush1.msra.mxu0 0.0
    %739 = vmatprep.subr.mxu0 0.0
    %740 = vmatpush1.msra.mxu0 0.0
    %741 = vmatprep.subr.mxu0 0.0
    %742 = vmatpush1.msra.mxu0 0.0
    %743 = vmatprep.subr.mxu0 0.0
    %744 = vmatpush1.msra.mxu0 0.0
    %745 = vmatprep.subr.mxu0 0.0
    %746 = vmatpush1.msra.mxu0 0.0
    %747 = vmatprep.subr.mxu0 0.0
    %748 = vmatpush1.msra.mxu0 0.0
    %749 = vmatprep.subr.mxu0 0.0
    %750 = vmatpush1.msra.mxu0 0.0
    %751 = vmatprep.subr.mxu0 0.0
    %752 = vmatpush1.msra.mxu0 0.0
    %753 = vmatprep.subr.mxu0 0.0
    %754 = vmatpush1.msra.mxu0 0.0
    %755 = vmatprep.subr.mxu0 0.0
    %756 = vmatpush1.msra.mxu0 0.0
    %757 = vmatprep.mubr.f32.mxu0 0.0
    %758 = vmatmul.mubr.f32.gmra.mrb[0].mxu0 %v690
    %v759 = vpop.f32.mrb[0].mxu0
    %v760 = vadd.f32 0.0, %v759
    %v761 = vpop.f32.mrb[0].mxu0
    %762 = vdwg.mxu0
    %763 = vmatprep.subr.mxu0 0.0
    %764 = vmatpush1.msra.mxu0 %v54
    %765 = vmatprep.subr.mxu0 0.0
    %766 = vmatpush1.msra.mxu0 %v55
    %767 = vmatprep.subr.mxu0 0.0
    %768 = vmatpush1.msra.mxu0 %v56
    %769 = vmatprep.subr.mxu0 0.0
    %770 = vmatpush1.msra.mxu0 %v57
    %771 = vmatprep.subr.mxu0 0.0
    %772 = vmatpush1.msra.mxu0 %v58
    %773 = vmatprep.subr.mxu0 0.0
    %774 = vmatpush1.msra.mxu0 %v59
    %775 = vmatprep.subr.mxu0 0.0
    %776 = vmatpush1.msra.mxu0 %v60
    %777 = vmatprep.subr.mxu0 0.0
    %778 = vmatpush1.msra.mxu0 %v61
    %779 = vmatprep.subr.mxu0 0.0
    %780 = vmatpush1.msra.mxu0 %v62
    %781 = vmatprep.subr.mxu0 0.0
    %782 = vmatpush1.msra.mxu0 %v63
    %783 = vmatprep.subr.mxu0 0.0
    %784 = vmatpush1.msra.mxu0 %v64
    %785 = vmatprep.subr.mxu0 0.0
    %786 = vmatpush1.msra.mxu0 %v65
    %787 = vmatprep.subr.mxu0 0.0
    %788 = vmatpush1.msra.mxu0 %v66
    %789 = vmatprep.subr.mxu0 0.0
    %790 = vmatpush1.msra.mxu0 %v67
    %791 = vmatprep.subr.mxu0 0.0
    %792 = vmatpush1.msra.mxu0 %v68
    %793 = vmatprep.subr.mxu0 0.0
    %794 = vmatpush1.msra.mxu0 %v69
    %795 = vmatprep.subr.mxu0 0.0
    %796 = vmatpush1.msra.mxu0 0.0
    %797 = vmatprep.subr.mxu0 0.0
    %798 = vmatpush1.msra.mxu0 0.0
    %799 = vmatprep.subr.mxu0 0.0
    %800 = vmatpush1.msra.mxu0 0.0
    %801 = vmatprep.subr.mxu0 0.0
    %802 = vmatpush1.msra.mxu0 0.0
    %803 = vmatprep.subr.mxu0 0.0
    %804 = vmatpush1.msra.mxu0 0.0
    %805 = vmatprep.subr.mxu0 0.0
    %806 = vmatpush1.msra.mxu0 0.0
    %807 = vmatprep.subr.mxu0 0.0
    %808 = vmatpush1.msra.mxu0 0.0
    %809 = vmatprep.subr.mxu0 0.0
    %810 = vmatpush1.msra.mxu0 0.0
    %811 = vmatprep.subr.mxu0 0.0
    %812 = vmatpush1.msra.mxu0 0.0
    %813 = vmatprep.subr.mxu0 0.0
    %814 = vmatpush1.msra.mxu0 0.0
    %815 = vmatprep.subr.mxu0 0.0
    %816 = vmatpush1.msra.mxu0 0.0
    %817 = vmatprep.subr.mxu0 0.0
    %818 = vmatpush1.msra.mxu0 0.0
    %819 = vmatprep.subr.mxu0 0.0
    %820 = vmatpush1.msra.mxu0 0.0
    %821 = vmatprep.subr.mxu0 0.0
    %822 = vmatpush1.msra.mxu0 0.0
    %823 = vmatprep.subr.mxu0 0.0
    %824 = vmatpush1.msra.mxu0 0.0
    %825 = vmatprep.subr.mxu0 0.0
    %826 = vmatpush1.msra.mxu0 0.0
    %827 = vmatprep.mubr.f32.mxu0 0.0
    %828 = vmatmul.mubr.f32.gmra.mrb[0].mxu0 %v692
    %v829 = vpop.f32.mrb[0].mxu0
    %v830 = vadd.f32 %v760, %v829
    %v831 = vpop.f32.mrb[0].mxu0
    %832 = vdwg.mxu0
    %v833 = vtanh.pop %v830
    %s834 = scalar_lea.vmem [#allocation2], 40
    %v835 = vld [vmem:[%s834] sm:$0xff]
    %836 = vmatprep.subr.mxu0 0.0
    %837 = vmatpush1.msra.mxu0 %v70
    %838 = vmatprep.subr.mxu0 0.0
    %839 = vmatpush1.msra.mxu0 %v71
    %840 = vmatprep.subr.mxu0 0.0
    %841 = vmatpush1.msra.mxu0 %v72
    %842 = vmatprep.subr.mxu0 0.0
    %843 = vmatpush1.msra.mxu0 %v73
    %844 = vmatprep.subr.mxu0 0.0
    %845 = vmatpush1.msra.mxu0 %v74
    %846 = vmatprep.subr.mxu0 0.0
    %847 = vmatpush1.msra.mxu0 %v75
    %848 = vmatprep.subr.mxu0 0.0
    %849 = vmatpush1.msra.mxu0 %v76
    %850 = vmatprep.subr.mxu0 0.0
    %851 = vmatpush1.msra.mxu0 %v77
    %852 = vmatprep.subr.mxu0 0.0
    %853 = vmatpush1.msra.mxu0 %v78
    %854 = vmatprep.subr.mxu0 0.0
    %855 = vmatpush1.msra.mxu0 %v79
    %856 = vmatprep.subr.mxu0 0.0
    %857 = vmatpush1.msra.mxu0 %v80
    %858 = vmatprep.subr.mxu0 0.0
    %859 = vmatpush1.msra.mxu0 %v81
    %860 = vmatprep.subr.mxu0 0.0
    %861 = vmatpush1.msra.mxu0 %v82
    %862 = vmatprep.subr.mxu0 0.0
    %863 = vmatpush1.msra.mxu0 %v83
    %864 = vmatprep.subr.mxu0 0.0
    %865 = vmatpush1.msra.mxu0 %v84
    %866 = vmatprep.subr.mxu0 0.0
    %867 = vmatpush1.msra.mxu0 %v85
    %868 = vmatprep.subr.mxu0 0.0
    %869 = vmatpush1.msra.mxu0 0.0
    %870 = vmatprep.subr.mxu0 0.0
    %871 = vmatpush1.msra.mxu0 0.0
    %872 = vmatprep.subr.mxu0 0.0
    %873 = vmatpush1.msra.mxu0 0.0
    %874 = vmatprep.subr.mxu0 0.0
    %875 = vmatpush1.msra.mxu0 0.0
    %876 = vmatprep.subr.mxu0 0.0
    %877 = vmatpush1.msra.mxu0 0.0
    %878 = vmatprep.subr.mxu0 0.0
    %879 = vmatpush1.msra.mxu0 0.0
    %880 = vmatprep.subr.mxu0 0.0
    %881 = vmatpush1.msra.mxu0 0.0
    %882 = vmatprep.subr.mxu0 0.0
    %883 = vmatpush1.msra.mxu0 0.0
    %884 = vmatprep.subr.mxu0 0.0
    %885 = vmatpush1.msra.mxu0 0.0
    %886 = vmatprep.subr.mxu0 0.0
    %887 = vmatpush1.msra.mxu0 0.0
    %888 = vmatprep.subr.mxu0 0.0
    %889 = vmatpush1.msra.mxu0 0.0
    %890 = vmatprep.subr.mxu0 0.0
    %891 = vmatpush1.msra.mxu0 0.0
    %892 = vmatprep.subr.mxu0 0.0
    %893 = vmatpush1.msra.mxu0 0.0
    %894 = vmatprep.subr.mxu0 0.0
    %895 = vmatpush1.msra.mxu0 0.0
    %896 = vmatprep.subr.mxu0 0.0
    %897 = vmatpush1.msra.mxu0 0.0
    %898 = vmatprep.subr.mxu0 0.0
    %899 = vmatpush1.msra.mxu0 0.0
    %900 = vmatprep.mubr.f32.mxu0 0.0
    %901 = vmatmul.mubr.f32.gmra.mrb[0].mxu0 %v833
    %v902 = vpop.f32.mrb[0].mxu0
    %v903 = vadd.f32 0.0, %v902
    %v904 = vpop.f32.mrb[0].mxu0
    %905 = vdwg.mxu0
    %906 = vmatprep.subr.mxu0 0.0
    %907 = vmatpush1.msra.mxu0 %v54
    %908 = vmatprep.subr.mxu0 0.0
    %909 = vmatpush1.msra.mxu0 %v55
    %910 = vmatprep.subr.mxu0 0.0
    %911 = vmatpush1.msra.mxu0 %v56
    %912 = vmatprep.subr.mxu0 0.0
    %913 = vmatpush1.msra.mxu0 %v57
    %914 = vmatprep.subr.mxu0 0.0
    %915 = vmatpush1.msra.mxu0 %v58
    %916 = vmatprep.subr.mxu0 0.0
    %917 = vmatpush1.msra.mxu0 %v59
    %918 = vmatprep.subr.mxu0 0.0
    %919 = vmatpush1.msra.mxu0 %v60
    %920 = vmatprep.subr.mxu0 0.0
    %921 = vmatpush1.msra.mxu0 %v61
    %922 = vmatprep.subr.mxu0 0.0
    %923 = vmatpush1.msra.mxu0 %v62
    %924 = vmatprep.subr.mxu0 0.0
    %925 = vmatpush1.msra.mxu0 %v63
    %926 = vmatprep.subr.mxu0 0.0
    %927 = vmatpush1.msra.mxu0 %v64
    %928 = vmatprep.subr.mxu0 0.0
    %929 = vmatpush1.msra.mxu0 %v65
    %930 = vmatprep.subr.mxu0 0.0
    %931 = vmatpush1.msra.mxu0 %v66
    %932 = vmatprep.subr.mxu0 0.0
    %933 = vmatpush1.msra.mxu0 %v67
    %934 = vmatprep.subr.mxu0 0.0
    %935 = vmatpush1.msra.mxu0 %v68
    %936 = vmatprep.subr.mxu0 0.0
    %937 = vmatpush1.msra.mxu0 %v69
    %938 = vmatprep.subr.mxu0 0.0
    %939 = vmatpush1.msra.mxu0 0.0
    %940 = vmatprep.subr.mxu0 0.0
    %941 = vmatpush1.msra.mxu0 0.0
    %942 = vmatprep.subr.mxu0 0.0
    %943 = vmatpush1.msra.mxu0 0.0
    %944 = vmatprep.subr.mxu0 0.0
    %945 = vmatpush1.msra.mxu0 0.0
    %946 = vmatprep.subr.mxu0 0.0
    %947 = vmatpush1.msra.mxu0 0.0
    %948 = vmatprep.subr.mxu0 0.0
    %949 = vmatpush1.msra.mxu0 0.0
    %950 = vmatprep.subr.mxu0 0.0
    %951 = vmatpush1.msra.mxu0 0.0
    %952 = vmatprep.subr.mxu0 0.0
    %953 = vmatpush1.msra.mxu0 0.0
    %954 = vmatprep.subr.mxu0 0.0
    %955 = vmatpush1.msra.mxu0 0.0
    %956 = vmatprep.subr.mxu0 0.0
    %957 = vmatpush1.msra.mxu0 0.0
    %958 = vmatprep.subr.mxu0 0.0
    %959 = vmatpush1.msra.mxu0 0.0
    %960 = vmatprep.subr.mxu0 0.0
    %961 = vmatpush1.msra.mxu0 0.0
    %962 = vmatprep.subr.mxu0 0.0
    %963 = vmatpush1.msra.mxu0 0.0
    %964 = vmatprep.subr.mxu0 0.0
    %965 = vmatpush1.msra.mxu0 0.0
    %966 = vmatprep.subr.mxu0 0.0
    %967 = vmatpush1.msra.mxu0 0.0
    %968 = vmatprep.subr.mxu0 0.0
    %969 = vmatpush1.msra.mxu0 0.0
    %970 = vmatprep.mubr.f32.mxu0 0.0
    %971 = vmatmul.mubr.f32.gmra.mrb[0].mxu0 %v835
    %v972 = vpop.f32.mrb[0].mxu0
    %v973 = vadd.f32 %v903, %v972
    %v974 = vpop.f32.mrb[0].mxu0
    %975 = vdwg.mxu0
    %v976 = vtanh.pop %v973
    %s977 = scalar_lea.vmem [#allocation2], 48
    %v978 = vld [vmem:[%s977] sm:$0xff]
    %979 = vmatprep.subr.mxu0 0.0
    %980 = vmatpush1.msra.mxu0 %v70
    %981 = vmatprep.subr.mxu0 0.0
    %982 = vmatpush1.msra.mxu0 %v71
    %983 = vmatprep.subr.mxu0 0.0
    %984 = vmatpush1.msra.mxu0 %v72
    %985 = vmatprep.subr.mxu0 0.0
    %986 = vmatpush1.msra.mxu0 %v73
    %987 = vmatprep.subr.mxu0 0.0
    %988 = vmatpush1.msra.mxu0 %v74
    %989 = vmatprep.subr.mxu0 0.0
    %990 = vmatpush1.msra.mxu0 %v75
    %991 = vmatprep.subr.mxu0 0.0
    %992 = vmatpush1.msra.mxu0 %v76
    %993 = vmatprep.subr.mxu0 0.0
    %994 = vmatpush1.msra.mxu0 %v77
    %995 = vmatprep.subr.mxu0 0.0
    %996 = vmatpush1.msra.mxu0 %v78
    %997 = vmatprep.subr.mxu0 0.0
    %998 = vmatpush1.msra.mxu0 %v79
    %999 = vmatprep.subr.mxu0 0.0
    %1000 = vmatpush1.msra.mxu0 %v80
    %1001 = vmatprep.subr.mxu0 0.0
    %1002 = vmatpush1.msra.mxu0 %v81
    %1003 = vmatprep.subr.mxu0 0.0
    %1004 = vmatpush1.msra.mxu0 %v82
    %1005 = vmatprep.subr.mxu0 0.0
    %1006 = vmatpush1.msra.mxu0 %v83
    %1007 = vmatprep.subr.mxu0 0.0
    %1008 = vmatpush1.msra.mxu0 %v84
    %1009 = vmatprep.subr.mxu0 0.0
    %1010 = vmatpush1.msra.mxu0 %v85
    %1011 = vmatprep.subr.mxu0 0.0
    %1012 = vmatpush1.msra.mxu0 0.0
    %1013 = vmatprep.subr.mxu0 0.0
    %1014 = vmatpush1.msra.mxu0 0.0
    %1015 = vmatprep.subr.mxu0 0.0
    %1016 = vmatpush1.msra.mxu0 0.0
    %1017 = vmatprep.subr.mxu0 0.0
    %1018 = vmatpush1.msra.mxu0 0.0
    %1019 = vmatprep.subr.mxu0 0.0
    %1020 = vmatpush1.msra.mxu0 0.0
    %1021 = vmatprep.subr.mxu0 0.0
    %1022 = vmatpush1.msra.mxu0 0.0
    %1023 = vmatprep.subr.mxu0 0.0
    %1024 = vmatpush1.msra.mxu0 0.0
    %1025 = vmatprep.subr.mxu0 0.0
    %1026 = vmatpush1.msra.mxu0 0.0
    %1027 = vmatprep.subr.mxu0 0.0
    %1028 = vmatpush1.msra.mxu0 0.0
    %1029 = vmatprep.subr.mxu0 0.0
    %1030 = vmatpush1.msra.mxu0 0.0
    %1031 = vmatprep.subr.mxu0 0.0
    %1032 = vmatpush1.msra.mxu0 0.0
    %1033 = vmatprep.subr.mxu0 0.0
    %1034 = vmatpush1.msra.mxu0 0.0
    %1035 = vmatprep.subr.mxu0 0.0
    %1036 = vmatpush1.msra.mxu0 0.0
    %1037 = vmatprep.subr.mxu0 0.0
    %1038 = vmatpush1.msra.mxu0 0.0
    %1039 = vmatprep.subr.mxu0 0.0
    %1040 = vmatpush1.msra.mxu0 0.0
    %1041 = vmatprep.subr.mxu0 0.0
    %1042 = vmatpush1.msra.mxu0 0.0
    %1043 = vmatprep.mubr.f32.mxu0 0.0
    %1044 = vmatmul.mubr.f32.gmra.mrb[0].mxu0 %v976
    %v1045 = vpop.f32.mrb[0].mxu0
    %v1046 = vadd.f32 0.0, %v1045
    %v1047 = vpop.f32.mrb[0].mxu0
    %1048 = vdwg.mxu0
    %1049 = vmatprep.subr.mxu0 0.0
    %1050 = vmatpush1.msra.mxu0 %v54
    %1051 = vmatprep.subr.mxu0 0.0
    %1052 = vmatpush1.msra.mxu0 %v55
    %1053 = vmatprep.subr.mxu0 0.0
    %1054 = vmatpush1.msra.mxu0 %v56
    %1055 = vmatprep.subr.mxu0 0.0
    %1056 = vmatpush1.msra.mxu0 %v57
    %1057 = vmatprep.subr.mxu0 0.0
    %1058 = vmatpush1.msra.mxu0 %v58
    %1059 = vmatprep.subr.mxu0 0.0
    %1060 = vmatpush1.msra.mxu0 %v59
    %1061 = vmatprep.subr.mxu0 0.0
    %1062 = vmatpush1.msra.mxu0 %v60
    %1063 = vmatprep.subr.mxu0 0.0
    %1064 = vmatpush1.msra.mxu0 %v61
    %1065 = vmatprep.subr.mxu0 0.0
    %1066 = vmatpush1.msra.mxu0 %v62
    %1067 = vmatprep.subr.mxu0 0.0
    %1068 = vmatpush1.msra.mxu0 %v63
    %1069 = vmatprep.subr.mxu0 0.0
    %1070 = vmatpush1.msra.mxu0 %v64
    %1071 = vmatprep.subr.mxu0 0.0
    %1072 = vmatpush1.msra.mxu0 %v65
    %1073 = vmatprep.subr.mxu0 0.0
    %1074 = vmatpush1.msra.mxu0 %v66
    %1075 = vmatprep.subr.mxu0 0.0
    %1076 = vmatpush1.msra.mxu0 %v67
    %1077 = vmatprep.subr.mxu0 0.0
    %1078 = vmatpush1.msra.mxu0 %v68
    %1079 = vmatprep.subr.mxu0 0.0
    %1080 = vmatpush1.msra.mxu0 %v69
    %1081 = vmatprep.subr.mxu0 0.0
    %1082 = vmatpush1.msra.mxu0 0.0
    %1083 = vmatprep.subr.mxu0 0.0
    %1084 = vmatpush1.msra.mxu0 0.0
    %1085 = vmatprep.subr.mxu0 0.0
    %1086 = vmatpush1.msra.mxu0 0.0
    %1087 = vmatprep.subr.mxu0 0.0
    %1088 = vmatpush1.msra.mxu0 0.0
    %1089 = vmatprep.subr.mxu0 0.0
    %1090 = vmatpush1.msra.mxu0 0.0
    %1091 = vmatprep.subr.mxu0 0.0
    %1092 = vmatpush1.msra.mxu0 0.0
    %1093 = vmatprep.subr.mxu0 0.0
    %1094 = vmatpush1.msra.mxu0 0.0
    %1095 = vmatprep.subr.mxu0 0.0
    %1096 = vmatpush1.msra.mxu0 0.0
    %1097 = vmatprep.subr.mxu0 0.0
    %1098 = vmatpush1.msra.mxu0 0.0
    %1099 = vmatprep.subr.mxu0 0.0
    %1100 = vmatpush1.msra.mxu0 0.0
    %1101 = vmatprep.subr.mxu0 0.0
    %1102 = vmatpush1.msra.mxu0 0.0
    %1103 = vmatprep.subr.mxu0 0.0
    %1104 = vmatpush1.msra.mxu0 0.0
    %1105 = vmatprep.subr.mxu0 0.0
    %1106 = vmatpush1.msra.mxu0 0.0
    %1107 = vmatprep.subr.mxu0 0.0
    %1108 = vmatpush1.msra.mxu0 0.0
    %1109 = vmatprep.subr.mxu0 0.0
    %1110 = vmatpush1.msra.mxu0 0.0
    %1111 = vmatprep.subr.mxu0 0.0
    %1112 = vmatpush1.msra.mxu0 0.0
    %1113 = vmatprep.mubr.f32.mxu0 0.0
    %1114 = vmatmul.mubr.f32.gmra.mrb[0].mxu0 %v978
    %v1115 = vpop.f32.mrb[0].mxu0
    %v1116 = vadd.f32 %v1046, %v1115
    %v1117 = vpop.f32.mrb[0].mxu0
    %1118 = vdwg.mxu0
    %v1119 = vtanh.pop %v1116
    %s1120 = scalar_lea.vmem [#allocation2], 56
    %v1121 = vld [vmem:[%s1120] sm:$0xff]
    %1122 = vmatprep.subr.mxu0 0.0
    %1123 = vmatpush1.msra.mxu0 %v70
    %1124 = vmatprep.subr.mxu0 0.0
    %1125 = vmatpush1.msra.mxu0 %v71
    %1126 = vmatprep.subr.mxu0 0.0
    %1127 = vmatpush1.msra.mxu0 %v72
    %1128 = vmatprep.subr.mxu0 0.0
    %1129 = vmatpush1.msra.mxu0 %v73
    %1130 = vmatprep.subr.mxu0 0.0
    %1131 = vmatpush1.msra.mxu0 %v74
    %1132 = vmatprep.subr.mxu0 0.0
    %1133 = vmatpush1.msra.mxu0 %v75
    %1134 = vmatprep.subr.mxu0 0.0
    %1135 = vmatpush1.msra.mxu0 %v76
    %1136 = vmatprep.subr.mxu0 0.0
    %1137 = vmatpush1.msra.mxu0 %v77
    %1138 = vmatprep.subr.mxu0 0.0
    %1139 = vmatpush1.msra.mxu0 %v78
    %1140 = vmatprep.subr.mxu0 0.0
    %1141 = vmatpush1.msra.mxu0 %v79
    %1142 = vmatprep.subr.mxu0 0.0
    %1143 = vmatpush1.msra.mxu0 %v80
    %1144 = vmatprep.subr.mxu0 0.0
    %1145 = vmatpush1.msra.mxu0 %v81
    %1146 = vmatprep.subr.mxu0 0.0
    %1147 = vmatpush1.msra.mxu0 %v82
    %1148 = vmatprep.subr.mxu0 0.0
    %1149 = vmatpush1.msra.mxu0 %v83
    %1150 = vmatprep.subr.mxu0 0.0
    %1151 = vmatpush1.msra.mxu0 %v84
    %1152 = vmatprep.subr.mxu0 0.0
    %1153 = vmatpush1.msra.mxu0 %v85
    %1154 = vmatprep.subr.mxu0 0.0
    %1155 = vmatpush1.msra.mxu0 0.0
    %1156 = vmatprep.subr.mxu0 0.0
    %1157 = vmatpush1.msra.mxu0 0.0
    %1158 = vmatprep.subr.mxu0 0.0
    %1159 = vmatpush1.msra.mxu0 0.0
    %1160 = vmatprep.subr.mxu0 0.0
    %1161 = vmatpush1.msra.mxu0 0.0
    %1162 = vmatprep.subr.mxu0 0.0
    %1163 = vmatpush1.msra.mxu0 0.0
    %1164 = vmatprep.subr.mxu0 0.0
    %1165 = vmatpush1.msra.mxu0 0.0
    %1166 = vmatprep.subr.mxu0 0.0
    %1167 = vmatpush1.msra.mxu0 0.0
    %1168 = vmatprep.subr.mxu0 0.0
    %1169 = vmatpush1.msra.mxu0 0.0
    %1170 = vmatprep.subr.mxu0 0.0
    %1171 = vmatpush1.msra.mxu0 0.0
    %1172 = vmatprep.subr.mxu0 0.0
    %1173 = vmatpush1.msra.mxu0 0.0
    %1174 = vmatprep.subr.mxu0 0.0
    %1175 = vmatpush1.msra.mxu0 0.0
    %1176 = vmatprep.subr.mxu0 0.0
    %1177 = vmatpush1.msra.mxu0 0.0
    %1178 = vmatprep.subr.mxu0 0.0
    %1179 = vmatpush1.msra.mxu0 0.0
    %1180 = vmatprep.subr.mxu0 0.0
    %1181 = vmatpush1.msra.mxu0 0.0
    %1182 = vmatprep.subr.mxu0 0.0
    %1183 = vmatpush1.msra.mxu0 0.0
    %1184 = vmatprep.subr.mxu0 0.0
    %1185 = vmatpush1.msra.mxu0 0.0
    %1186 = vmatprep.mubr.f32.mxu0 0.0
    %1187 = vmatmul.mubr.f32.gmra.mrb[0].mxu0 %v1119
    %v1188 = vpop.f32.mrb[0].mxu0
    %v1189 = vadd.f32 0.0, %v1188
    %v1190 = vpop.f32.mrb[0].mxu0
    %1191 = vdwg.mxu0
    %1192 = vmatprep.subr.mxu0 0.0
    %1193 = vmatpush1.msra.mxu0 %v54
    %1194 = vmatprep.subr.mxu0 0.0
    %1195 = vmatpush1.msra.mxu0 %v55
    %1196 = vmatprep.subr.mxu0 0.0
    %1197 = vmatpush1.msra.mxu0 %v56
    %1198 = vmatprep.subr.mxu0 0.0
    %1199 = vmatpush1.msra.mxu0 %v57
    %1200 = vmatprep.subr.mxu0 0.0
    %1201 = vmatpush1.msra.mxu0 %v58
    %1202 = vmatprep.subr.mxu0 0.0
    %1203 = vmatpush1.msra.mxu0 %v59
    %1204 = vmatprep.subr.mxu0 0.0
    %1205 = vmatpush1.msra.mxu0 %v60
    %1206 = vmatprep.subr.mxu0 0.0
    %1207 = vmatpush1.msra.mxu0 %v61
    %1208 = vmatprep.subr.mxu0 0.0
    %1209 = vmatpush1.msra.mxu0 %v62
    %1210 = vmatprep.subr.mxu0 0.0
    %1211 = vmatpush1.msra.mxu0 %v63
    %1212 = vmatprep.subr.mxu0 0.0
    %1213 = vmatpush1.msra.mxu0 %v64
    %1214 = vmatprep.subr.mxu0 0.0
    %1215 = vmatpush1.msra.mxu0 %v65
    %1216 = vmatprep.subr.mxu0 0.0
    %1217 = vmatpush1.msra.mxu0 %v66
    %1218 = vmatprep.subr.mxu0 0.0
    %1219 = vmatpush1.msra.mxu0 %v67
    %1220 = vmatprep.subr.mxu0 0.0
    %1221 = vmatpush1.msra.mxu0 %v68
    %1222 = vmatprep.subr.mxu0 0.0
    %1223 = vmatpush1.msra.mxu0 %v69
    %1224 = vmatprep.subr.mxu0 0.0
    %1225 = vmatpush1.msra.mxu0 0.0
    %1226 = vmatprep.subr.mxu0 0.0
    %1227 = vmatpush1.msra.mxu0 0.0
    %1228 = vmatprep.subr.mxu0 0.0
    %1229 = vmatpush1.msra.mxu0 0.0
    %1230 = vmatprep.subr.mxu0 0.0
    %1231 = vmatpush1.msra.mxu0 0.0
    %1232 = vmatprep.subr.mxu0 0.0
    %1233 = vmatpush1.msra.mxu0 0.0
    %1234 = vmatprep.subr.mxu0 0.0
    %1235 = vmatpush1.msra.mxu0 0.0
    %1236 = vmatprep.subr.mxu0 0.0
    %1237 = vmatpush1.msra.mxu0 0.0
    %1238 = vmatprep.subr.mxu0 0.0
    %1239 = vmatpush1.msra.mxu0 0.0
    %1240 = vmatprep.subr.mxu0 0.0
    %1241 = vmatpush1.msra.mxu0 0.0
    %1242 = vmatprep.subr.mxu0 0.0
    %1243 = vmatpush1.msra.mxu0 0.0
    %1244 = vmatprep.subr.mxu0 0.0
    %1245 = vmatpush1.msra.mxu0 0.0
    %1246 = vmatprep.subr.mxu0 0.0
    %1247 = vmatpush1.msra.mxu0 0.0
    %1248 = vmatprep.subr.mxu0 0.0
    %1249 = vmatpush1.msra.mxu0 0.0
    %1250 = vmatprep.subr.mxu0 0.0
    %1251 = vmatpush1.msra.mxu0 0.0
    %1252 = vmatprep.subr.mxu0 0.0
    %1253 = vmatpush1.msra.mxu0 0.0
    %1254 = vmatprep.subr.mxu0 0.0
    %1255 = vmatpush1.msra.mxu0 0.0
    %1256 = vmatprep.mubr.f32.mxu0 0.0
    %1257 = vmatmul.mubr.f32.gmra.mrb[0].mxu0 %v1121
    %v1258 = vpop.f32.mrb[0].mxu0
    %v1259 = vadd.f32 %v1189, %v1258
    %v1260 = vpop.f32.mrb[0].mxu0
    %1261 = vdwg.mxu0
    %v1262 = vtanh.pop %v1259
    %1263 = vmatprep.subr.mxu0 0.0
    %1264 = vmatpush1.msra.mxu0 %v86
    %1265 = vmatprep.subr.mxu0 0.0
    %1266 = vmatpush1.msra.mxu0 %v87
    %1267 = vmatprep.subr.mxu0 0.0
    %1268 = vmatpush1.msra.mxu0 %v88
    %1269 = vmatprep.subr.mxu0 0.0
    %1270 = vmatpush1.msra.mxu0 %v89
    %1271 = vmatprep.subr.mxu0 0.0
    %1272 = vmatpush1.msra.mxu0 %v90
    %1273 = vmatprep.subr.mxu0 0.0
    %1274 = vmatpush1.msra.mxu0 %v91
    %1275 = vmatprep.subr.mxu0 0.0
    %1276 = vmatpush1.msra.mxu0 %v92
    %1277 = vmatprep.subr.mxu0 0.0
    %1278 = vmatpush1.msra.mxu0 %v93
    %1279 = vmatprep.subr.mxu0 0.0
    %1280 = vmatpush1.msra.mxu0 %v94
    %1281 = vmatprep.subr.mxu0 0.0
    %1282 = vmatpush1.msra.mxu0 %v95
    %1283 = vmatprep.subr.mxu0 0.0
    %1284 = vmatpush1.msra.mxu0 %v96
    %1285 = vmatprep.subr.mxu0 0.0
    %1286 = vmatpush1.msra.mxu0 %v97
    %1287 = vmatprep.subr.mxu0 0.0
    %1288 = vmatpush1.msra.mxu0 %v98
    %1289 = vmatprep.subr.mxu0 0.0
    %1290 = vmatpush1.msra.mxu0 %v99
    %1291 = vmatprep.subr.mxu0 0.0
    %1292 = vmatpush1.msra.mxu0 %v100
    %1293 = vmatprep.subr.mxu0 0.0
    %1294 = vmatpush1.msra.mxu0 %v101
    %1295 = vmatprep.subr.mxu0 0.0
    %1296 = vmatpush1.msra.mxu0 0.0
    %1297 = vmatprep.subr.mxu0 0.0
    %1298 = vmatpush1.msra.mxu0 0.0
    %1299 = vmatprep.subr.mxu0 0.0
    %1300 = vmatpush1.msra.mxu0 0.0
    %1301 = vmatprep.subr.mxu0 0.0
    %1302 = vmatpush1.msra.mxu0 0.0
    %1303 = vmatprep.subr.mxu0 0.0
    %1304 = vmatpush1.msra.mxu0 0.0
    %1305 = vmatprep.subr.mxu0 0.0
    %1306 = vmatpush1.msra.mxu0 0.0
    %1307 = vmatprep.subr.mxu0 0.0
    %1308 = vmatpush1.msra.mxu0 0.0
    %1309 = vmatprep.subr.mxu0 0.0
    %1310 = vmatpush1.msra.mxu0 0.0
    %1311 = vmatprep.subr.mxu0 0.0
    %1312 = vmatpush1.msra.mxu0 0.0
    %1313 = vmatprep.subr.mxu0 0.0
    %1314 = vmatpush1.msra.mxu0 0.0
    %1315 = vmatprep.subr.mxu0 0.0
    %1316 = vmatpush1.msra.mxu0 0.0
    %1317 = vmatprep.subr.mxu0 0.0
    %1318 = vmatpush1.msra.mxu0 0.0
    %1319 = vmatprep.subr.mxu0 0.0
    %1320 = vmatpush1.msra.mxu0 0.0
    %1321 = vmatprep.subr.mxu0 0.0
    %1322 = vmatpush1.msra.mxu0 0.0
    %1323 = vmatprep.subr.mxu0 0.0
    %1324 = vmatpush1.msra.mxu0 0.0
    %1325 = vmatprep.subr.mxu0 0.0
    %1326 = vmatpush1.msra.mxu0 0.0
    %1327 = vmatprep.mubr.f32.mxu0 0.0
    %1328 = vmatmul.mubr.f32.gmra.mrb[0].mxu0 %v1262
    %v1329 = vpop.f32.mrb[0].mxu0
    %v1330 = vadd.f32 0.0, %v1329
    %v1331 = vpop.f32.mrb[0].mxu0
    %1332 = vdwg.mxu0
    %v1333 = vmax.f32 %v1330, 0.0
    %v1334 = vlaneseq
    %v1335 = vshrl.u32 %v1334, 7
    %v1336 = vsub.s32 0, %v1335
    %v1337 = vrot.slane %v118, %v1336
    %1338 = vmatprep.subr.mxu0 0.0
    %1339 = vmatpush1.msra.mxu0 %v102
    %1340 = vmatprep.subr.mxu0 0.0
    %1341 = vmatpush1.msra.mxu0 %v103
    %1342 = vmatprep.subr.mxu0 0.0
    %1343 = vmatpush1.msra.mxu0 %v104
    %1344 = vmatprep.subr.mxu0 0.0
    %1345 = vmatpush1.msra.mxu0 %v105
    %1346 = vmatprep.subr.mxu0 0.0
    %1347 = vmatpush1.msra.mxu0 %v106
    %1348 = vmatprep.subr.mxu0 0.0
    %1349 = vmatpush1.msra.mxu0 %v107
    %1350 = vmatprep.subr.mxu0 0.0
    %1351 = vmatpush1.msra.mxu0 %v108
    %1352 = vmatprep.subr.mxu0 0.0
    %1353 = vmatpush1.msra.mxu0 %v109
    %1354 = vmatprep.subr.mxu0 0.0
    %1355 = vmatpush1.msra.mxu0 %v110
    %1356 = vmatprep.subr.mxu0 0.0
    %1357 = vmatpush1.msra.mxu0 %v111
    %1358 = vmatprep.subr.mxu0 0.0
    %1359 = vmatpush1.msra.mxu0 %v112
    %1360 = vmatprep.subr.mxu0 0.0
    %1361 = vmatpush1.msra.mxu0 %v113
    %1362 = vmatprep.subr.mxu0 0.0
    %1363 = vmatpush1.msra.mxu0 %v114
    %1364 = vmatprep.subr.mxu0 0.0
    %1365 = vmatpush1.msra.mxu0 %v115
    %1366 = vmatprep.subr.mxu0 0.0
    %1367 = vmatpush1.msra.mxu0 %v116
    %1368 = vmatprep.subr.mxu0 0.0
    %1369 = vmatpush1.msra.mxu0 %v117
    %1370 = vmatprep.subr.mxu0 0.0
    %1371 = vmatpush1.msra.mxu0 0.0
    %1372 = vmatprep.subr.mxu0 0.0
    %1373 = vmatpush1.msra.mxu0 0.0
    %1374 = vmatprep.subr.mxu0 0.0
    %1375 = vmatpush1.msra.mxu0 0.0
    %1376 = vmatprep.subr.mxu0 0.0
    %1377 = vmatpush1.msra.mxu0 0.0
    %1378 = vmatprep.subr.mxu0 0.0
    %1379 = vmatpush1.msra.mxu0 0.0
    %1380 = vmatprep.subr.mxu0 0.0
    %1381 = vmatpush1.msra.mxu0 0.0
    %1382 = vmatprep.subr.mxu0 0.0
    %1383 = vmatpush1.msra.mxu0 0.0
    %1384 = vmatprep.subr.mxu0 0.0
    %1385 = vmatpush1.msra.mxu0 0.0
    %1386 = vmatprep.subr.mxu0 0.0
    %1387 = vmatpush1.msra.mxu0 0.0
    %1388 = vmatprep.subr.mxu0 0.0
    %1389 = vmatpush1.msra.mxu0 0.0
    %1390 = vmatprep.subr.mxu0 0.0
    %1391 = vmatpush1.msra.mxu0 0.0
    %1392 = vmatprep.subr.mxu0 0.0
    %1393 = vmatpush1.msra.mxu0 0.0
    %1394 = vmatprep.subr.mxu0 0.0
    %1395 = vmatpush1.msra.mxu0 0.0
    %1396 = vmatprep.subr.mxu0 0.0
    %1397 = vmatpush1.msra.mxu0 0.0
    %1398 = vmatprep.subr.mxu0 0.0
    %1399 = vmatpush1.msra.mxu0 0.0
    %1400 = vmatprep.subr.mxu0 0.0
    %1401 = vmatpush1.msra.mxu0 0.0
    %1402 = vmatprep.mubr.f32.mxu0 0.0
    %1403 = vmatmul.mubr.f32.gmra.mrb[0].mxu0 %v1333
    %v1404 = vpop.f32.mrb[0].mxu0
    %v1405 = vadd.f32 %v1337, %v1404
    %v1406 = vpop.f32.mrb[0].mxu0
    %1407 = vdwg.mxu0
    %1408 = vst [vmem:[#allocation8] sm:$0xff] %v1405
    // Predicated region
    $region26: #{tpu_custom_call.1} parent=1 // pred_check
      _
    $region27: #{tpu_custom_call.1} parent=1 // pred_check_branch
      %1410 = sbr.rel (0) target = $region29
    $region28: #{tpu_custom_call.1} parent=1 // pred_region
      %s1412 = ssub.s32 128, 128
      %1413 = vsyncadd [#allocation4], %s1412
      %s1415 = sshll.u32 [#allocation8], 4
      %s1416 = int_to_ptr.vmem [resolvable:$true] %s1415
      %1418 = dma.vmem_to_hbm [thread:$0]  %s1416, 128, %s3, [#allocation4]
    $region29: #{tpu_custom_call.1} parent=1 // pred_fallthru
      _
    // Predicated region
    $region30: #{tpu_custom_call.1} parent=1 // pred_check
      _
    $region31: #{tpu_custom_call.1} parent=1 // pred_check_branch
      %1420 = sbr.rel (0) target = $region33
    $region32: #{tpu_custom_call.1} parent=1 // pred_region
      %1421 = dma.done [#allocation4], 128
    $region33: #{tpu_custom_call.1} parent=1 // pred_fallthru
      _
    %1422 = vsyncpa [#allocation3], 1
    %1423 = vsyncpa [#allocation6], 1
    %1424 = vsyncpa [#allocation4], 1

</llo_original>
